<compile_context>
chip_gen: v7x
topology: tpu7x:2x2x1
jax: 0.10.0
libtpu: 0.0.40
codegen_flags: <defaults>
</compile_context>

<pallas_src>
import math
import functools

import jax
import jax.numpy as jnp
from jax import lax
from jax.experimental import pallas as pl
from jax.experimental.pallas import tpu as pltpu


# ----------------------------------------------------------------------------
# tiling helpers
# ----------------------------------------------------------------------------
def _pick_tile(dim, target, align):
    """Largest tile <= target that is a multiple of `align` and divides `dim`;
    falls back to the full dim (always a legal block shape)."""
    if dim <= target:
        return dim
    t = (target // align) * align
    while t >= align:
        if dim % t == 0:
            return t
        t -= align
    return dim


def _heads_per_block(n_head, d_tensor, d_model):
    """How many heads to pack per SDPA block so the last block dim is either
    the full d_model or a lane-dense multiple of 128."""
    if d_model <= 128:
        return n_head
    for hb in range(1, n_head + 1):
        if n_head % hb == 0 and (hb * d_tensor) % 128 == 0:
            return hb
    return n_head


# ----------------------------------------------------------------------------
# Kernel 1: tiled linear  y = x @ W + b  (+ optional fused GELU)
#   bf16 operands, f32 accumulation, grid=(M/tm, N/tn) marked parallel.
# ----------------------------------------------------------------------------
def _linear_kernel(x_ref, w_ref, b_ref, o_ref, *, activation):
    acc = jnp.dot(x_ref[...], w_ref[...], preferred_element_type=jnp.float32)
    y = acc + b_ref[...]
    if activation == "gelu":
        # tanh-approx GELU (matches jax.nn.gelu(approximate=True); PyTorch's exact
        # erf GELU differs by <1e-3).
        c = 0.7978845608028654  # sqrt(2/pi)
        y = 0.5 * y * (1.0 + jnp.tanh(c * (y + 0.044715 * (y * y * y))))
    o_ref[...] = y.astype(o_ref.dtype)


def linear(x, w, b, *, activation=None, out_dtype=jnp.float32):
    """x: (M, K), w: (K, N), b: (N,) -> (M, N) in out_dtype."""
    M, K = x.shape
    K2, N = w.shape
    assert K == K2
    x_bf = x.astype(jnp.bfloat16)
    w_bf = w.astype(jnp.bfloat16)
    b2 = b.reshape(1, N).astype(jnp.float32)

    tm = _pick_tile(M, 256, 8)
    tn = _pick_tile(N, 256, 128)
    grid = (M // tm, N // tn)

    return pl.pallas_call(
        functools.partial(_linear_kernel, activation=activation),
        out_shape=jax.ShapeDtypeStruct((M, N), out_dtype),
        grid=grid,
        in_specs=[
            pl.BlockSpec((tm, K), lambda i, j: (i, 0)),
            pl.BlockSpec((K, tn), lambda i, j: (0, j)),
            pl.BlockSpec((1, tn), lambda i, j: (0, j)),
        ],
        out_specs=pl.BlockSpec((tm, tn), lambda i, j: (i, j)),
        compiler_params=pltpu.CompilerParams(
            dimension_semantics=("parallel", "parallel")),
    )(x_bf, w_bf, b2)


# ----------------------------------------------------------------------------
# Kernel 2: scaled dot-product attention on the fused QKV activation.
#   One (batch, head-block) tile per grid step; heads sliced via static column
#   offsets inside the block; score via last-axis dot_general (no k.T).
# ----------------------------------------------------------------------------
def _sdpa_kernel(q_ref, k_ref, v_ref, o_ref, *, heads, d_tensor,
                 q_off, k_off, v_off, scale):
    # TODO(synk): attention mask (masked_fill) not implemented; mask must be None.
    out_parts = []
    for h in range(heads):
        lo = h * d_tensor
        hi = (h + 1) * d_tensor
        qh = q_ref[0, :, q_off + lo:q_off + hi]            # (L, D) bf16
        kh = k_ref[0, :, k_off + lo:k_off + hi]            # (L, D) bf16
        vh = v_ref[0, :, v_off + lo:v_off + hi]            # (L, D) bf16
        # score[l, m] = sum_d q[l, d] * k[m, d]  -- contraction on last axis of both.
        s = lax.dot_general(qh, kh, (((1,), (1,)), ((), ())),
                            preferred_element_type=jnp.float32) * scale
        s = s - jnp.max(s, axis=-1, keepdims=True)
        p = jnp.exp(s)
        inv = pl.reciprocal(jnp.sum(p, axis=-1, keepdims=True), approx=True)
        p = (p * inv).astype(vh.dtype)
        out_parts.append(
            lax.dot_general(p, vh, (((1,), (0,)), ((), ())),
                            preferred_element_type=jnp.float32))
    out = out_parts[0] if heads == 1 else jnp.concatenate(out_parts, axis=-1)
    o_ref[0] = out.astype(o_ref.dtype)


def fused_attention(qkv, n_head):
    """qkv: (B, L, 3*d_model) bf16 (q | k | v along last dim) -> (B, L, d_model) bf16."""
    B, L, three_d = qkv.shape
    d_model = three_d // 3
    d_tensor = d_model // n_head
    hb = _heads_per_block(n_head, d_tensor, d_model)
    hd = hb * d_tensor
    n_blk = n_head // hb
    scale = 1.0 / math.sqrt(d_tensor)

    if hd % 128 == 0:
        # Lane-dense head-column blocks sliced straight out of the fused qkv tensor.
        blk_w = hd
        q_map = lambda b, h: (b, 0, h)
        k_map = lambda b, h: (b, 0, n_blk + h)
        v_map = lambda b, h: (b, 0, 2 * n_blk + h)
        offs = (0, 0, 0)
    else:
        # Small d_model: take the full fused row and slice q/k/v inside the kernel.
        blk_w = three_d
        q_map = k_map = v_map = lambda b, h: (b, 0, 0)
        offs = (0, d_model, 2 * d_model)

    kern = functools.partial(_sdpa_kernel, heads=hb, d_tensor=d_tensor,
                             q_off=offs[0], k_off=offs[1], v_off=offs[2],
                             scale=scale)
    # TODO(synk): for very long sequences on v7x (64 MiB VMEM) switch to a
    # flash-style KV-tiled loop; full-L score tiles are used here.
    return pl.pallas_call(
        kern,
        out_shape=jax.ShapeDtypeStruct((B, L, d_model), jnp.bfloat16),
        grid=(B, n_blk),
        in_specs=[pl.BlockSpec((1, L, blk_w), q_map),
                  pl.BlockSpec((1, L, blk_w), k_map),
                  pl.BlockSpec((1, L, blk_w), v_map)],
        out_specs=pl.BlockSpec((1, L, hd), lambda b, h: (b, 0, h)),
        compiler_params=pltpu.CompilerParams(
            dimension_semantics=("parallel", "parallel")),
    )(qkv, qkv, qkv)


# ----------------------------------------------------------------------------
# Kernel 3: fused residual add + LayerNorm (f32 math)
# ----------------------------------------------------------------------------
def _add_ln_kernel(x_ref, r_ref, g_ref, b_ref, o_ref, *, eps):
    x = x_ref[...].astype(jnp.float32) + r_ref[...].astype(jnp.float32)
    mean = jnp.mean(x, axis=-1, keepdims=True)
    xc = x - mean
    var = jnp.mean(xc * xc, axis=-1, keepdims=True)
    y = xc * lax.rsqrt(var + eps)
    y = y * g_ref[...].astype(jnp.float32) + b_ref[...].astype(jnp.float32)
    o_ref[...] = y.astype(o_ref.dtype)


def add_layernorm(x, residual, gamma, beta, *, eps=1e-5):
    """x, residual: (M, N) -> LayerNorm(x + residual) over last dim, f32."""
    M, N = x.shape
    tm = _pick_tile(M, 512, 8)
    g2 = gamma.reshape(1, N)
    b2 = beta.reshape(1, N)
    return pl.pallas_call(
        functools.partial(_add_ln_kernel, eps=eps),
        out_shape=jax.ShapeDtypeStruct((M, N), jnp.float32),
        grid=(M // tm,),
        in_specs=[pl.BlockSpec((tm, N), lambda i: (i, 0)),
                  pl.BlockSpec((tm, N), lambda i: (i, 0)),
                  pl.BlockSpec((1, N), lambda i: (0, 0)),
                  pl.BlockSpec((1, N), lambda i: (0, 0))],
        out_specs=pl.BlockSpec((tm, N), lambda i: (i, 0)),
        compiler_params=pltpu.CompilerParams(dimension_semantics=("parallel",)),
    )(x, residual, g2, b2)


# ----------------------------------------------------------------------------
# Parameters + forward glue
# ----------------------------------------------------------------------------
def init_params(key, d_model, ffn_hidden, n_head):
    """Mirrors the PyTorch module's nn.Linear/nn.LayerNorm default init.
    Linear weights stored as [in, out]; q/k/v fused along the output dim."""
    assert d_model % n_head == 0
    ks = jax.random.split(key, 12)

    def mk(kw, kb, fan_in, fan_out):
        bound = 1.0 / math.sqrt(fan_in)
        w = jax.random.uniform(kw, (fan_in, fan_out), jnp.float32, -bound, bound)
        b = jax.random.uniform(kb, (fan_out,), jnp.float32, -bound, bound)
        return w, b

    wq, bq = mk(ks[0], ks[1], d_model, d_model)
    wk, bk = mk(ks[2], ks[3], d_model, d_model)
    wv, bv = mk(ks[4], ks[5], d_model, d_model)
    wc, bc = mk(ks[6], ks[7], d_model, d_model)
    w1, b1 = mk(ks[8], ks[9], d_model, ffn_hidden)
    w2, b2 = mk(ks[10], ks[11], ffn_hidden, d_model)
    return {
        "w_qkv": jnp.concatenate([wq, wk, wv], axis=1),
        "b_qkv": jnp.concatenate([bq, bk, bv]),
        "w_concat": wc, "b_concat": bc,
        "w_ff1": w1, "b_ff1": b1,
        "w_ff2": w2, "b_ff2": b2,
        "ln1_g": jnp.ones((d_model,), jnp.float32),
        "ln1_b": jnp.zeros((d_model,), jnp.float32),
        "ln2_g": jnp.ones((d_model,), jnp.float32),
        "ln2_b": jnp.zeros((d_model,), jnp.float32),
    }


def attention_layer_forward(params, x, n_head, mask=None):
    """x: (B, L, d_model) f32 -> (B, L, d_model) f32.  Inference-mode forward."""
    assert mask is None  # TODO(synk): src_mask / masked_fill not implemented.
    B, L, d_model = x.shape
    assert d_model % n_head == 0
    M = B * L
    x2 = x.reshape(M, d_model)

    # --- Attention block ---
    # fused Q|K|V projection: read x once, one wide matmul.
    qkv = linear(x2, params["w_qkv"], params["b_qkv"], out_dtype=jnp.bfloat16)
    qkv = qkv.reshape(B, L, 3 * d_model)

    attn = fused_attention(qkv, n_head)                       # (B, L, d_model) bf16
    attn = linear(attn.reshape(M, d_model),
                  params["w_concat"], params["b_concat"],
                  out_dtype=jnp.float32)

    h1 = add_layernorm(attn, x2, params["ln1_g"], params["ln1_b"])
    # dropout1: identity in inference mode.  TODO(synk): no train-mode dropout.

    # --- FeedForward block (GELU fused into the first matmul) ---
    ff = linear(h1, params["w_ff1"], params["b_ff1"],
                activation="gelu", out_dtype=jnp.bfloat16)
    ff = linear(ff, params["w_ff2"], params["b_ff2"], out_dtype=jnp.float32)

    out = add_layernorm(ff, h1, params["ln2_g"], params["ln2_b"])
    # dropout2: identity in inference mode.
    return out.reshape(B, L, d_model)


# ----------------------------------------------------------------------------
# Pure-JAX reference (f32) for a sanity check
# ----------------------------------------------------------------------------
def attention_layer_reference(params, x, n_head):
    B, L, d_model = x.shape
    d_tensor = d_model // n_head

    def lin(t, w, b):
        return t @ w + b

    def ln(y, g, b, eps=1e-5):
        m = y.mean(-1, keepdims=True)
        v = ((y - m) ** 2).mean(-1, keepdims=True)
        return (y - m) / jnp.sqrt(v + eps) * g + b

    qkv = lin(x, params["w_qkv"], params["b_qkv"])
    q, k, v = jnp.split(qkv, 3, axis=-1)

    def split(t):
        return t.reshape(B, L, n_head, d_tensor).transpose(0, 2, 1, 3)

    qh, kh, vh = split(q), split(k), split(v)
    s = jnp.einsum("bhld,bhmd->bhlm", qh, kh) / math.sqrt(d_tensor)
    p = jax.nn.softmax(s, axis=-1)
    oh = jnp.einsum("bhlm,bhmd->bhld", p, vh)
    o = oh.transpose(0, 2, 1, 3).reshape(B, L, d_model)
    attn = lin(o, params["w_concat"], params["b_concat"])

    h1 = ln(x + attn, params["ln1_g"], params["ln1_b"])
    ff = jax.nn.gelu(lin(h1, params["w_ff1"], params["b_ff1"]), approximate=True)
    ff = lin(ff, params["w_ff2"], params["b_ff2"])
    return ln(h1 + ff, params["ln2_g"], params["ln2_b"])


if __name__ == "__main__":
    batch, length, d_model, n_head, ffn_hidden = 2, 8, 32, 4, 64

    key = jax.random.PRNGKey(0)
    kp, kx = jax.random.split(key)
    params = init_params(kp, d_model, ffn_hidden, n_head)
    x = jax.random.normal(kx, (batch, length, d_model), jnp.float32)

    fwd = jax.jit(attention_layer_forward, static_argnums=(2,))
    out = fwd(params, x, n_head)
    out = jax.block_until_ready(out)

    ref = attention_layer_reference(params, x, n_head)
    assert out.shape == (batch, length, d_model)
    # bf16 matmul operands (f32 accumulation) vs. pure-f32 reference -> loose tolerance.
    assert jnp.allclose(out, ref, atol=5e-2, rtol=5e-2), \
        float(jnp.max(jnp.abs(out - ref)))

    print("KERNEL_OK")
</pallas_src>

<mosaic_0001>
module attributes {stable_mosaic.version = 11 : i64} {
  func.func @_linear_kernel(%arg0: i32, %arg1: i32, %arg2: memref<16x32xbf16, #tpu.memory_space<vmem>>, %arg3: memref<32x96xbf16, #tpu.memory_space<vmem>>, %arg4: memref<1x96xf32, #tpu.memory_space<vmem>>, %arg5: memref<16x96xbf16, #tpu.memory_space<vmem>>) attributes {dimension_semantics = [#tpu.dimension_semantics<parallel>, #tpu.dimension_semantics<parallel>], iteration_bounds = array<i64: 1, 1>, scalar_prefetch = 0 : i64, scratch_operands = 0 : i64, tpu.core_type = #tpu.core_type<tc>, window_params = [{transform_indices = @transform_0, window_bounds = array<i64: 16, 32>}, {transform_indices = @transform_1, window_bounds = array<i64: 32, 96>}, {transform_indices = @transform_2, window_bounds = array<i64: 1, 96>}, {transform_indices = @transform_3, window_bounds = array<i64: 16, 96>}]} {
    %c0 = arith.constant 0 : index
    %c0_0 = arith.constant 0 : index
    %0 = vector.load %arg2[%c0, %c0_0] : memref<16x32xbf16, #tpu.memory_space<vmem>>, vector<16x32xbf16>
    %c0_1 = arith.constant 0 : index
    %c0_2 = arith.constant 0 : index
    %1 = vector.load %arg3[%c0_1, %c0_2] : memref<32x96xbf16, #tpu.memory_space<vmem>>, vector<32x96xbf16>
    %cst = arith.constant dense<0.000000e+00> : vector<16x96xf32>
    %2 = tpu.matmul %0, %1, %cst {dimension_numbers = #tpu.dot_dimension_numbers<[1], [0], [0], [1], [0, 0, 1, 1], [], []>} : vector<16x32xbf16>, vector<32x96xbf16>, vector<16x96xf32> -> vector<16x96xf32>
    %c0_3 = arith.constant 0 : index
    %c0_4 = arith.constant 0 : index
    %3 = vector.load %arg4[%c0_3, %c0_4] : memref<1x96xf32, #tpu.memory_space<vmem>>, vector<1x96xf32>
    %4 = vector.broadcast %3 : vector<1x96xf32> to vector<16x96xf32>
    %5 = arith.addf %2, %4 : vector<16x96xf32>
    %6 = arith.truncf %5 : vector<16x96xf32> to vector<16x96xbf16>
    %c0_5 = arith.constant 0 : index
    %c0_6 = arith.constant 0 : index
    %7 = vector.load %arg5[%c0_5, %c0_6] : memref<16x96xbf16, #tpu.memory_space<vmem>>, vector<16x96xbf16>
    tpu.vector_store %arg5[%c0_5, %c0_6], %6 {strides = array<i32>} : memref<16x96xbf16, #tpu.memory_space<vmem>>, vector<16x96xbf16>,
    return
  }
  func.func @transform_0(%arg0: i32, %arg1: i32) -> (i32, i32) {
    %c0_i32 = arith.constant 0 : i32
    %c0_i32_0 = arith.constant 0 : i32
    return %arg0, %c0_i32 : i32, i32
  }
  func.func @transform_1(%arg0: i32, %arg1: i32) -> (i32, i32) {
    %c0_i32 = arith.constant 0 : i32
    %c0_i32_0 = arith.constant 0 : i32
    return %c0_i32, %arg1 : i32, i32
  }
  func.func @transform_2(%arg0: i32, %arg1: i32) -> (i32, i32) {
    %c0_i32 = arith.constant 0 : i32
    %c0_i32_0 = arith.constant 0 : i32
    return %c0_i32, %arg1 : i32, i32
  }
  func.func @transform_3(%arg0: i32, %arg1: i32) -> (i32, i32) {
    %c0_i32 = arith.constant 0 : i32
    return %arg0, %arg1 : i32, i32
  }
}

module attributes {stable_mosaic.version = 11 : i64} {
  func.func @_sdpa_kernel(%arg0: i32, %arg1: i32, %arg2: memref<1x8x96xbf16, #tpu.memory_space<vmem>>, %arg3: memref<1x8x96xbf16, #tpu.memory_space<vmem>>, %arg4: memref<1x8x96xbf16, #tpu.memory_space<vmem>>, %arg5: memref<1x8x32xbf16, #tpu.memory_space<vmem>>) attributes {dimension_semantics = [#tpu.dimension_semantics<parallel>, #tpu.dimension_semantics<parallel>], iteration_bounds = array<i64: 2, 1>, scalar_prefetch = 0 : i64, scratch_operands = 0 : i64, tpu.core_type = #tpu.core_type<tc>, window_params = [{transform_indices = @transform_0, window_bounds = array<i64: 1, 8, 96>}, {transform_indices = @transform_1, window_bounds = array<i64: 1, 8, 96>}, {transform_indices = @transform_2, window_bounds = array<i64: 1, 8, 96>}, {transform_indices = @transform_3, window_bounds = array<i64: 1, 8, 32>}]} {
    %c0 = arith.constant 0 : index
    %c0_0 = arith.constant 0 : index
    %c0_1 = arith.constant 0 : index
    %0 = vector.load %arg2[%c0, %c0_0, %c0_1] : memref<1x8x96xbf16, #tpu.memory_space<vmem>>, vector<1x8x8xbf16>
    %1 = vector.shape_cast %0 : vector<1x8x8xbf16> to vector<8x8xbf16>
    %c0_2 = arith.constant 0 : index
    %c0_3 = arith.constant 0 : index
    %c32 = arith.constant 32 : index
    %2 = vector.load %arg3[%c0_2, %c0_3, %c32] : memref<1x8x96xbf16, #tpu.memory_space<vmem>>, vector<1x8x8xbf16>
    %3 = vector.shape_cast %2 : vector<1x8x8xbf16> to vector<8x8xbf16>
    %c0_4 = arith.constant 0 : index
    %c0_5 = arith.constant 0 : index
    %c64 = arith.constant 64 : index
    %4 = vector.load %arg4[%c0_4, %c0_5, %c64] : memref<1x8x96xbf16, #tpu.memory_space<vmem>>, vector<1x8x8xbf16>
    %5 = vector.shape_cast %4 : vector<1x8x8xbf16> to vector<8x8xbf16>
    %cst = arith.constant dense<0.000000e+00> : vector<8x8xf32>
    %6 = tpu.matmul %1, %3, %cst {dimension_numbers = #tpu.dot_dimension_numbers<[1], [1], [0], [0], [0, 0, 1, 0], [], []>} : vector<8x8xbf16>, vector<8x8xbf16>, vector<8x8xf32> -> vector<8x8xf32>
    %cst_6 = arith.constant 0.353553385 : f32
    %7 = vector.broadcast %cst_6 : f32 to vector<8x8xf32>
    %8 = arith.mulf %6, %7 : vector<8x8xf32>
    %cst_7 = arith.constant dense<0xFF800000> : vector<8xf32>
    %9 = vector.multi_reduction <maximumf>, %8, %cst_7 [1] : vector<8x8xf32> to vector<8xf32>
    %10 = vector.shape_cast %9 : vector<8xf32> to vector<8x1xf32>
    %11 = vector.broadcast %10 : vector<8x1xf32> to vector<8x8xf32>
    %12 = arith.subf %8, %11 : vector<8x8xf32>
    %13 = math.exp %12 : vector<8x8xf32>
    %cst_8 = arith.constant dense<0.000000e+00> : vector<8xf32>
    %14 = vector.multi_reduction <add>, %13, %cst_8 [1] : vector<8x8xf32> to vector<8xf32>
    %15 = vector.shape_cast %14 : vector<8xf32> to vector<8x1xf32>
    %16 = tpu.reciprocal %15 {approx = true} : vector<8x1xf32> -> vector<8x1xf32>
    %17 = vector.broadcast %16 : vector<8x1xf32> to vector<8x8xf32>
    %18 = arith.mulf %13, %17 : vector<8x8xf32>
    %19 = arith.truncf %18 : vector<8x8xf32> to vector<8x8xbf16>
    %cst_9 = arith.constant dense<0.000000e+00> : vector<8x8xf32>
    %20 = tpu.matmul %19, %5, %cst_9 {dimension_numbers = #tpu.dot_dimension_numbers<[1], [0], [0], [1], [0, 0, 1, 1], [], []>} : vector<8x8xbf16>, vector<8x8xbf16>, vector<8x8xf32> -> vector<8x8xf32>
    %c0_10 = arith.constant 0 : index
    %c0_11 = arith.constant 0 : index
    %c8 = arith.constant 8 : index
    %21 = vector.load %arg2[%c0_10, %c0_11, %c8] : memref<1x8x96xbf16, #tpu.memory_space<vmem>>, vector<1x8x8xbf16>
    %22 = vector.shape_cast %21 : vector<1x8x8xbf16> to vector<8x8xbf16>
    %c0_12 = arith.constant 0 : index
    %c0_13 = arith.constant 0 : index
    %c40 = arith.constant 40 : index
    %23 = vector.load %arg3[%c0_12, %c0_13, %c40] : memref<1x8x96xbf16, #tpu.memory_space<vmem>>, vector<1x8x8xbf16>
    %24 = vector.shape_cast %23 : vector<1x8x8xbf16> to vector<8x8xbf16>
    %c0_14 = arith.constant 0 : index
    %c0_15 = arith.constant 0 : index
    %c72 = arith.constant 72 : index
    %25 = vector.load %arg4[%c0_14, %c0_15, %c72] : memref<1x8x96xbf16, #tpu.memory_space<vmem>>, vector<1x8x8xbf16>
    %26 = vector.shape_cast %25 : vector<1x8x8xbf16> to vector<8x8xbf16>
    %cst_16 = arith.constant dense<0.000000e+00> : vector<8x8xf32>
    %27 = tpu.matmul %22, %24, %cst_16 {dimension_numbers = #tpu.dot_dimension_numbers<[1], [1], [0], [0], [0, 0, 1, 0], [], []>} : vector<8x8xbf16>, vector<8x8xbf16>, vector<8x8xf32> -> vector<8x8xf32>
    %cst_17 = arith.constant 0.353553385 : f32
    %28 = vector.broadcast %cst_17 : f32 to vector<8x8xf32>
    %29 = arith.mulf %27, %28 : vector<8x8xf32>
    %cst_18 = arith.constant dense<0xFF800000> : vector<8xf32>
    %30 = vector.multi_reduction <maximumf>, %29, %cst_18 [1] : vector<8x8xf32> to vector<8xf32>
    %31 = vector.shape_cast %30 : vector<8xf32> to vector<8x1xf32>
    %32 = vector.broadcast %31 : vector<8x1xf32> to vector<8x8xf32>
    %33 = arith.subf %29, %32 : vector<8x8xf32>
    %34 = math.exp %33 : vector<8x8xf32>
    %cst_19 = arith.constant dense<0.000000e+00> : vector<8xf32>
    %35 = vector.multi_reduction <add>, %34, %cst_19 [1] : vector<8x8xf32> to vector<8xf32>
    %36 = vector.shape_cast %35 : vector<8xf32> to vector<8x1xf32>
    %37 = tpu.reciprocal %36 {approx = true} : vector<8x1xf32> -> vector<8x1xf32>
    %38 = vector.broadcast %37 : vector<8x1xf32> to vector<8x8xf32>
    %39 = arith.mulf %34, %38 : vector<8x8xf32>
    %40 = arith.truncf %39 : vector<8x8xf32> to vector<8x8xbf16>
    %cst_20 = arith.constant dense<0.000000e+00> : vector<8x8xf32>
    %41 = tpu.matmul %40, %26, %cst_20 {dimension_numbers = #tpu.dot_dimension_numbers<[1], [0], [0], [1], [0, 0, 1, 1], [], []>} : vector<8x8xbf16>, vector<8x8xbf16>, vector<8x8xf32> -> vector<8x8xf32>
    %c0_21 = arith.constant 0 : index
    %c0_22 = arith.constant 0 : index
    %c16 = arith.constant 16 : index
    %42 = vector.load %arg2[%c0_21, %c0_22, %c16] : memref<1x8x96xbf16, #tpu.memory_space<vmem>>, vector<1x8x8xbf16>
    %43 = vector.shape_cast %42 : vector<1x8x8xbf16> to vector<8x8xbf16>
    %c0_23 = arith.constant 0 : index
    %c0_24 = arith.constant 0 : index
    %c48 = arith.constant 48 : index
    %44 = vector.load %arg3[%c0_23, %c0_24, %c48] : memref<1x8x96xbf16, #tpu.memory_space<vmem>>, vector<1x8x8xbf16>
    %45 = vector.shape_cast %44 : vector<1x8x8xbf16> to vector<8x8xbf16>
    %c0_25 = arith.constant 0 : index
    %c0_26 = arith.constant 0 : index
    %c80 = arith.constant 80 : index
    %46 = vector.load %arg4[%c0_25, %c0_26, %c80] : memref<1x8x96xbf16, #tpu.memory_space<vmem>>, vector<1x8x8xbf16>
    %47 = vector.shape_cast %46 : vector<1x8x8xbf16> to vector<8x8xbf16>
    %cst_27 = arith.constant dense<0.000000e+00> : vector<8x8xf32>
    %48 = tpu.matmul %43, %45, %cst_27 {dimension_numbers = #tpu.dot_dimension_numbers<[1], [1], [0], [0], [0, 0, 1, 0], [], []>} : vector<8x8xbf16>, vector<8x8xbf16>, vector<8x8xf32> -> vector<8x8xf32>
    %cst_28 = arith.constant 0.353553385 : f32
    %49 = vector.broadcast %cst_28 : f32 to vector<8x8xf32>
    %50 = arith.mulf %48, %49 : vector<8x8xf32>
    %cst_29 = arith.constant dense<0xFF800000> : vector<8xf32>
    %51 = vector.multi_reduction <maximumf>, %50, %cst_29 [1] : vector<8x8xf32> to vector<8xf32>
    %52 = vector.shape_cast %51 : vector<8xf32> to vector<8x1xf32>
    %53 = vector.broadcast %52 : vector<8x1xf32> to vector<8x8xf32>
    %54 = arith.subf %50, %53 : vector<8x8xf32>
    %55 = math.exp %54 : vector<8x8xf32>
    %cst_30 = arith.constant dense<0.000000e+00> : vector<8xf32>
    %56 = vector.multi_reduction <add>, %55, %cst_30 [1] : vector<8x8xf32> to vector<8xf32>
    %57 = vector.shape_cast %56 : vector<8xf32> to vector<8x1xf32>
    %58 = tpu.reciprocal %57 {approx = true} : vector<8x1xf32> -> vector<8x1xf32>
    %59 = vector.broadcast %58 : vector<8x1xf32> to vector<8x8xf32>
    %60 = arith.mulf %55, %59 : vector<8x8xf32>
    %61 = arith.truncf %60 : vector<8x8xf32> to vector<8x8xbf16>
    %cst_31 = arith.constant dense<0.000000e+00> : vector<8x8xf32>
    %62 = tpu.matmul %61, %47, %cst_31 {dimension_numbers = #tpu.dot_dimension_numbers<[1], [0], [0], [1], [0, 0, 1, 1], [], []>} : vector<8x8xbf16>, vector<8x8xbf16>, vector<8x8xf32> -> vector<8x8xf32>
    %c0_32 = arith.constant 0 : index
    %c0_33 = arith.constant 0 : index
    %c24 = arith.constant 24 : index
    %63 = vector.load %arg2[%c0_32, %c0_33, %c24] : memref<1x8x96xbf16, #tpu.memory_space<vmem>>, vector<1x8x8xbf16>
    %64 = vector.shape_cast %63 : vector<1x8x8xbf16> to vector<8x8xbf16>
    %c0_34 = arith.constant 0 : index
    %c0_35 = arith.constant 0 : index
    %c56 = arith.constant 56 : index
    %65 = vector.load %arg3[%c0_34, %c0_35, %c56] : memref<1x8x96xbf16, #tpu.memory_space<vmem>>, vector<1x8x8xbf16>
    %66 = vector.shape_cast %65 : vector<1x8x8xbf16> to vector<8x8xbf16>
    %c0_36 = arith.constant 0 : index
    %c0_37 = arith.constant 0 : index
    %c88 = arith.constant 88 : index
    %67 = vector.load %arg4[%c0_36, %c0_37, %c88] : memref<1x8x96xbf16, #tpu.memory_space<vmem>>, vector<1x8x8xbf16>
    %68 = vector.shape_cast %67 : vector<1x8x8xbf16> to vector<8x8xbf16>
    %cst_38 = arith.constant dense<0.000000e+00> : vector<8x8xf32>
    %69 = tpu.matmul %64, %66, %cst_38 {dimension_numbers = #tpu.dot_dimension_numbers<[1], [1], [0], [0], [0, 0, 1, 0], [], []>} : vector<8x8xbf16>, vector<8x8xbf16>, vector<8x8xf32> -> vector<8x8xf32>
    %cst_39 = arith.constant 0.353553385 : f32
    %70 = vector.broadcast %cst_39 : f32 to vector<8x8xf32>
    %71 = arith.mulf %69, %70 : vector<8x8xf32>
    %cst_40 = arith.constant dense<0xFF800000> : vector<8xf32>
    %72 = vector.multi_reduction <maximumf>, %71, %cst_40 [1] : vector<8x8xf32> to vector<8xf32>
    %73 = vector.shape_cast %72 : vector<8xf32> to vector<8x1xf32>
    %74 = vector.broadcast %73 : vector<8x1xf32> to vector<8x8xf32>
    %75 = arith.subf %71, %74 : vector<8x8xf32>
    %76 = math.exp %75 : vector<8x8xf32>
    %cst_41 = arith.constant dense<0.000000e+00> : vector<8xf32>
    %77 = vector.multi_reduction <add>, %76, %cst_41 [1] : vector<8x8xf32> to vector<8xf32>
    %78 = vector.shape_cast %77 : vector<8xf32> to vector<8x1xf32>
    %79 = tpu.reciprocal %78 {approx = true} : vector<8x1xf32> -> vector<8x1xf32>
    %80 = vector.broadcast %79 : vector<8x1xf32> to vector<8x8xf32>
    %81 = arith.mulf %76, %80 : vector<8x8xf32>
    %82 = arith.truncf %81 : vector<8x8xf32> to vector<8x8xbf16>
    %cst_42 = arith.constant dense<0.000000e+00> : vector<8x8xf32>
    %83 = tpu.matmul %82, %68, %cst_42 {dimension_numbers = #tpu.dot_dimension_numbers<[1], [0], [0], [1], [0, 0, 1, 1], [], []>} : vector<8x8xbf16>, vector<8x8xbf16>, vector<8x8xf32> -> vector<8x8xf32>
    %84 = tpu.concatenate %20, %41, %62, %83 in 1 : vector<8x8xf32>, vector<8x8xf32>, vector<8x8xf32>, vector<8x8xf32> -> vector<8x32xf32>
    %85 = arith.truncf %84 : vector<8x32xf32> to vector<8x32xbf16>
    %c0_43 = arith.constant 0 : index
    %c0_44 = arith.constant 0 : index
    %c0_45 = arith.constant 0 : index
    %86 = vector.load %arg5[%c0_43, %c0_44, %c0_45] : memref<1x8x32xbf16, #tpu.memory_space<vmem>>, vector<1x8x32xbf16>
    %87 = vector.shape_cast %86 : vector<1x8x32xbf16> to vector<8x32xbf16>
    %88 = vector.shape_cast %85 : vector<8x32xbf16> to vector<1x8x32xbf16>
    tpu.vector_store %arg5[%c0_43, %c0_44, %c0_45], %88 {strides = array<i32>} : memref<1x8x32xbf16, #tpu.memory_space<vmem>>, vector<1x8x32xbf16>,
    return
  }
  func.func @transform_0(%arg0: i32, %arg1: i32) -> (i32, i32, i32) {
    %c0_i32 = arith.constant 0 : i32
    %c0_i32_0 = arith.constant 0 : i32
    %c0_i32_1 = arith.constant 0 : i32
    return %arg0, %c0_i32, %c0_i32_0 : i32, i32, i32
  }
  func.func @transform_1(%arg0: i32, %arg1: i32) -> (i32, i32, i32) {
    %c0_i32 = arith.constant 0 : i32
    %c0_i32_0 = arith.constant 0 : i32
    %c0_i32_1 = arith.constant 0 : i32
    return %arg0, %c0_i32, %c0_i32_0 : i32, i32, i32
  }
  func.func @transform_2(%arg0: i32, %arg1: i32) -> (i32, i32, i32) {
    %c0_i32 = arith.constant 0 : i32
    %c0_i32_0 = arith.constant 0 : i32
    %c0_i32_1 = arith.constant 0 : i32
    return %arg0, %c0_i32, %c0_i32_0 : i32, i32, i32
  }
  func.func @transform_3(%arg0: i32, %arg1: i32) -> (i32, i32, i32) {
    %c0_i32 = arith.constant 0 : i32
    %c0_i32_0 = arith.constant 0 : i32
    return %arg0, %c0_i32, %arg1 : i32, i32, i32
  }
}

module attributes {stable_mosaic.version = 11 : i64} {
  func.func @_add_ln_kernel(%arg0: i32, %arg1: memref<16x32xf32, #tpu.memory_space<vmem>>, %arg2: memref<16x32xf32, #tpu.memory_space<vmem>>, %arg3: memref<1x32xf32, #tpu.memory_space<vmem>>, %arg4: memref<1x32xf32, #tpu.memory_space<vmem>>, %arg5: memref<16x32xf32, #tpu.memory_space<vmem>>) attributes {dimension_semantics = [#tpu.dimension_semantics<parallel>], iteration_bounds = array<i64: 1>, scalar_prefetch = 0 : i64, scratch_operands = 0 : i64, tpu.core_type = #tpu.core_type<tc>, window_params = [{transform_indices = @transform_0, window_bounds = array<i64: 16, 32>}, {transform_indices = @transform_1, window_bounds = array<i64: 16, 32>}, {pipeline_mode = #tpu.pipeline_mode<synchronous>, transform_indices = @transform_2, window_bounds = array<i64: 1, 32>}, {pipeline_mode = #tpu.pipeline_mode<synchronous>, transform_indices = @transform_3, window_bounds = array<i64: 1, 32>}, {transform_indices = @transform_4, window_bounds = array<i64: 16, 32>}]} {
    %c0 = arith.constant 0 : index
    %c0_0 = arith.constant 0 : index
    %0 = vector.load %arg1[%c0, %c0_0] : memref<16x32xf32, #tpu.memory_space<vmem>>, vector<16x32xf32>
    %c0_1 = arith.constant 0 : index
    %c0_2 = arith.constant 0 : index
    %1 = vector.load %arg2[%c0_1, %c0_2] : memref<16x32xf32, #tpu.memory_space<vmem>>, vector<16x32xf32>
    %2 = arith.addf %0, %1 : vector<16x32xf32>
    %cst = arith.constant dense<0.000000e+00> : vector<16xf32>
    %3 = vector.multi_reduction <add>, %2, %cst [1] : vector<16x32xf32> to vector<16xf32>
    %4 = vector.shape_cast %3 : vector<16xf32> to vector<16x1xf32>
    %cst_3 = arith.constant 3.200000e+01 : f32
    %5 = vector.broadcast %cst_3 : f32 to vector<16x1xf32>
    %6 = arith.divf %4, %5 : vector<16x1xf32>
    %7 = vector.broadcast %6 : vector<16x1xf32> to vector<16x32xf32>
    %8 = arith.subf %2, %7 : vector<16x32xf32>
    %9 = arith.mulf %8, %8 : vector<16x32xf32>
    %cst_4 = arith.constant dense<0.000000e+00> : vector<16xf32>
    %10 = vector.multi_reduction <add>, %9, %cst_4 [1] : vector<16x32xf32> to vector<16xf32>
    %11 = vector.shape_cast %10 : vector<16xf32> to vector<16x1xf32>
    %cst_5 = arith.constant 3.200000e+01 : f32
    %12 = vector.broadcast %cst_5 : f32 to vector<16x1xf32>
    %13 = arith.divf %11, %12 : vector<16x1xf32>
    %cst_6 = arith.constant 9.99999974E-6 : f32
    %14 = vector.broadcast %cst_6 : f32 to vector<16x1xf32>
    %15 = arith.addf %13, %14 : vector<16x1xf32>
    %16 = math.rsqrt %15 : vector<16x1xf32>
    %17 = vector.broadcast %16 : vector<16x1xf32> to vector<16x32xf32>
    %18 = arith.mulf %8, %17 : vector<16x32xf32>
    %c0_7 = arith.constant 0 : index
    %c0_8 = arith.constant 0 : index
    %19 = vector.load %arg3[%c0_7, %c0_8] : memref<1x32xf32, #tpu.memory_space<vmem>>, vector<1x32xf32>
    %20 = vector.broadcast %19 : vector<1x32xf32> to vector<16x32xf32>
    %21 = arith.mulf %18, %20 : vector<16x32xf32>
    %c0_9 = arith.constant 0 : index
    %c0_10 = arith.constant 0 : index
    %22 = vector.load %arg4[%c0_9, %c0_10] : memref<1x32xf32, #tpu.memory_space<vmem>>, vector<1x32xf32>
    %23 = vector.broadcast %22 : vector<1x32xf32> to vector<16x32xf32>
    %24 = arith.addf %21, %23 : vector<16x32xf32>
    %c0_11 = arith.constant 0 : index
    %c0_12 = arith.constant 0 : index
    %25 = vector.load %arg5[%c0_11, %c0_12] : memref<16x32xf32, #tpu.memory_space<vmem>>, vector<16x32xf32>
    tpu.vector_store %arg5[%c0_11, %c0_12], %24 {strides = array<i32>} : memref<16x32xf32, #tpu.memory_space<vmem>>, vector<16x32xf32>,
    return
  }
  func.func @transform_0(%arg0: i32) -> (i32, i32) {
    %c0_i32 = arith.constant 0 : i32
    %c0_i32_0 = arith.constant 0 : i32
    return %arg0, %c0_i32 : i32, i32
  }
  func.func @transform_1(%arg0: i32) -> (i32, i32) {
    %c0_i32 = arith.constant 0 : i32
    %c0_i32_0 = arith.constant 0 : i32
    return %arg0, %c0_i32 : i32, i32
  }
  func.func @transform_2(%arg0: i32) -> (i32, i32) {
    %c0_i32 = arith.constant 0 : i32
    %c0_i32_0 = arith.constant 0 : i32
    %c0_i32_1 = arith.constant 0 : i32
    return %c0_i32, %c0_i32_0 : i32, i32
  }
  func.func @transform_3(%arg0: i32) -> (i32, i32) {
    %c0_i32 = arith.constant 0 : i32
    %c0_i32_0 = arith.constant 0 : i32
    %c0_i32_1 = arith.constant 0 : i32
    return %c0_i32, %c0_i32_0 : i32, i32
  }
  func.func @transform_4(%arg0: i32) -> (i32, i32) {
    %c0_i32 = arith.constant 0 : i32
    %c0_i32_0 = arith.constant 0 : i32
    return %arg0, %c0_i32 : i32, i32
  }
}

module attributes {stable_mosaic.version = 11 : i64} {
  func.func @_linear_kernel(%arg0: i32, %arg1: i32, %arg2: memref<16x32xbf16, #tpu.memory_space<vmem>>, %arg3: memref<32x32xbf16, #tpu.memory_space<vmem>>, %arg4: memref<1x32xf32, #tpu.memory_space<vmem>>, %arg5: memref<16x32xf32, #tpu.memory_space<vmem>>) attributes {dimension_semantics = [#tpu.dimension_semantics<parallel>, #tpu.dimension_semantics<parallel>], iteration_bounds = array<i64: 1, 1>, scalar_prefetch = 0 : i64, scratch_operands = 0 : i64, tpu.core_type = #tpu.core_type<tc>, window_params = [{transform_indices = @transform_0, window_bounds = array<i64: 16, 32>}, {transform_indices = @transform_1, window_bounds = array<i64: 32, 32>}, {transform_indices = @transform_2, window_bounds = array<i64: 1, 32>}, {transform_indices = @transform_3, window_bounds = array<i64: 16, 32>}]} {
    %c0 = arith.constant 0 : index
    %c0_0 = arith.constant 0 : index
    %0 = vector.load %arg2[%c0, %c0_0] : memref<16x32xbf16, #tpu.memory_space<vmem>>, vector<16x32xbf16>
    %c0_1 = arith.constant 0 : index
    %c0_2 = arith.constant 0 : index
    %1 = vector.load %arg3[%c0_1, %c0_2] : memref<32x32xbf16, #tpu.memory_space<vmem>>, vector<32x32xbf16>
    %cst = arith.constant dense<0.000000e+00> : vector<16x32xf32>
    %2 = tpu.matmul %0, %1, %cst {dimension_numbers = #tpu.dot_dimension_numbers<[1], [0], [0], [1], [0, 0, 1, 1], [], []>} : vector<16x32xbf16>, vector<32x32xbf16>, vector<16x32xf32> -> vector<16x32xf32>
    %c0_3 = arith.constant 0 : index
    %c0_4 = arith.constant 0 : index
    %3 = vector.load %arg4[%c0_3, %c0_4] : memref<1x32xf32, #tpu.memory_space<vmem>>, vector<1x32xf32>
    %4 = vector.broadcast %3 : vector<1x32xf32> to vector<16x32xf32>
    %5 = arith.addf %2, %4 : vector<16x32xf32>
    %c0_5 = arith.constant 0 : index
    %c0_6 = arith.constant 0 : index
    %6 = vector.load %arg5[%c0_5, %c0_6] : memref<16x32xf32, #tpu.memory_space<vmem>>, vector<16x32xf32>
    tpu.vector_store %arg5[%c0_5, %c0_6], %5 {strides = array<i32>} : memref<16x32xf32, #tpu.memory_space<vmem>>, vector<16x32xf32>,
    return
  }
  func.func @transform_0(%arg0: i32, %arg1: i32) -> (i32, i32) {
    %c0_i32 = arith.constant 0 : i32
    %c0_i32_0 = arith.constant 0 : i32
    return %arg0, %c0_i32 : i32, i32
  }
  func.func @transform_1(%arg0: i32, %arg1: i32) -> (i32, i32) {
    %c0_i32 = arith.constant 0 : i32
    %c0_i32_0 = arith.constant 0 : i32
    return %c0_i32, %arg1 : i32, i32
  }
  func.func @transform_2(%arg0: i32, %arg1: i32) -> (i32, i32) {
    %c0_i32 = arith.constant 0 : i32
    %c0_i32_0 = arith.constant 0 : i32
    return %c0_i32, %arg1 : i32, i32
  }
  func.func @transform_3(%arg0: i32, %arg1: i32) -> (i32, i32) {
    %c0_i32 = arith.constant 0 : i32
    return %arg0, %arg1 : i32, i32
  }
}

module attributes {stable_mosaic.version = 11 : i64} {
  func.func @_add_ln_kernel(%arg0: i32, %arg1: memref<16x32xf32, #tpu.memory_space<vmem>>, %arg2: memref<16x32xf32, #tpu.memory_space<vmem>>, %arg3: memref<1x32xf32, #tpu.memory_space<vmem>>, %arg4: memref<1x32xf32, #tpu.memory_space<vmem>>, %arg5: memref<16x32xf32, #tpu.memory_space<vmem>>) attributes {dimension_semantics = [#tpu.dimension_semantics<parallel>], iteration_bounds = array<i64: 1>, scalar_prefetch = 0 : i64, scratch_operands = 0 : i64, tpu.core_type = #tpu.core_type<tc>, window_params = [{transform_indices = @transform_0, window_bounds = array<i64: 16, 32>}, {transform_indices = @transform_1, window_bounds = array<i64: 16, 32>}, {pipeline_mode = #tpu.pipeline_mode<synchronous>, transform_indices = @transform_2, window_bounds = array<i64: 1, 32>}, {pipeline_mode = #tpu.pipeline_mode<synchronous>, transform_indices = @transform_3, window_bounds = array<i64: 1, 32>}, {transform_indices = @transform_4, window_bounds = array<i64: 16, 32>}]} {
    %c0 = arith.constant 0 : index
    %c0_0 = arith.constant 0 : index
    %0 = vector.load %arg1[%c0, %c0_0] : memref<16x32xf32, #tpu.memory_space<vmem>>, vector<16x32xf32>
    %c0_1 = arith.constant 0 : index
    %c0_2 = arith.constant 0 : index
    %1 = vector.load %arg2[%c0_1, %c0_2] : memref<16x32xf32, #tpu.memory_space<vmem>>, vector<16x32xf32>
    %2 = arith.addf %0, %1 : vector<16x32xf32>
    %cst = arith.constant dense<0.000000e+00> : vector<16xf32>
    %3 = vector.multi_reduction <add>, %2, %cst [1] : vector<16x32xf32> to vector<16xf32>
    %4 = vector.shape_cast %3 : vector<16xf32> to vector<16x1xf32>
    %cst_3 = arith.constant 3.200000e+01 : f32
    %5 = vector.broadcast %cst_3 : f32 to vector<16x1xf32>
    %6 = arith.divf %4, %5 : vector<16x1xf32>
    %7 = vector.broadcast %6 : vector<16x1xf32> to vector<16x32xf32>
    %8 = arith.subf %2, %7 : vector<16x32xf32>
    %9 = arith.mulf %8, %8 : vector<16x32xf32>
    %cst_4 = arith.constant dense<0.000000e+00> : vector<16xf32>
    %10 = vector.multi_reduction <add>, %9, %cst_4 [1] : vector<16x32xf32> to vector<16xf32>
    %11 = vector.shape_cast %10 : vector<16xf32> to vector<16x1xf32>
    %cst_5 = arith.constant 3.200000e+01 : f32
    %12 = vector.broadcast %cst_5 : f32 to vector<16x1xf32>
    %13 = arith.divf %11, %12 : vector<16x1xf32>
    %cst_6 = arith.constant 9.99999974E-6 : f32
    %14 = vector.broadcast %cst_6 : f32 to vector<16x1xf32>
    %15 = arith.addf %13, %14 : vector<16x1xf32>
    %16 = math.rsqrt %15 : vector<16x1xf32>
    %17 = vector.broadcast %16 : vector<16x1xf32> to vector<16x32xf32>
    %18 = arith.mulf %8, %17 : vector<16x32xf32>
    %c0_7 = arith.constant 0 : index
    %c0_8 = arith.constant 0 : index
    %19 = vector.load %arg3[%c0_7, %c0_8] : memref<1x32xf32, #tpu.memory_space<vmem>>, vector<1x32xf32>
    %20 = vector.broadcast %19 : vector<1x32xf32> to vector<16x32xf32>
    %21 = arith.mulf %18, %20 : vector<16x32xf32>
    %c0_9 = arith.constant 0 : index
    %c0_10 = arith.constant 0 : index
    %22 = vector.load %arg4[%c0_9, %c0_10] : memref<1x32xf32, #tpu.memory_space<vmem>>, vector<1x32xf32>
    %23 = vector.broadcast %22 : vector<1x32xf32> to vector<16x32xf32>
    %24 = arith.addf %21, %23 : vector<16x32xf32>
    %c0_11 = arith.constant 0 : index
    %c0_12 = arith.constant 0 : index
    %25 = vector.load %arg5[%c0_11, %c0_12] : memref<16x32xf32, #tpu.memory_space<vmem>>, vector<16x32xf32>
    tpu.vector_store %arg5[%c0_11, %c0_12], %24 {strides = array<i32>} : memref<16x32xf32, #tpu.memory_space<vmem>>, vector<16x32xf32>,
    return
  }
  func.func @transform_0(%arg0: i32) -> (i32, i32) {
    %c0_i32 = arith.constant 0 : i32
    %c0_i32_0 = arith.constant 0 : i32
    return %arg0, %c0_i32 : i32, i32
  }
  func.func @transform_1(%arg0: i32) -> (i32, i32) {
    %c0_i32 = arith.constant 0 : i32
    %c0_i32_0 = arith.constant 0 : i32
    return %arg0, %c0_i32 : i32, i32
  }
  func.func @transform_2(%arg0: i32) -> (i32, i32) {
    %c0_i32 = arith.constant 0 : i32
    %c0_i32_0 = arith.constant 0 : i32
    %c0_i32_1 = arith.constant 0 : i32
    return %c0_i32, %c0_i32_0 : i32, i32
  }
  func.func @transform_3(%arg0: i32) -> (i32, i32) {
    %c0_i32 = arith.constant 0 : i32
    %c0_i32_0 = arith.constant 0 : i32
    %c0_i32_1 = arith.constant 0 : i32
    return %c0_i32, %c0_i32_0 : i32, i32
  }
  func.func @transform_4(%arg0: i32) -> (i32, i32) {
    %c0_i32 = arith.constant 0 : i32
    %c0_i32_0 = arith.constant 0 : i32
    return %arg0, %c0_i32 : i32, i32
  }
}

module attributes {stable_mosaic.version = 11 : i64} {
  func.func @_linear_kernel(%arg0: i32, %arg1: i32, %arg2: memref<16x32xbf16, #tpu.memory_space<vmem>>, %arg3: memref<32x64xbf16, #tpu.memory_space<vmem>>, %arg4: memref<1x64xf32, #tpu.memory_space<vmem>>, %arg5: memref<16x64xbf16, #tpu.memory_space<vmem>>) attributes {dimension_semantics = [#tpu.dimension_semantics<parallel>, #tpu.dimension_semantics<parallel>], iteration_bounds = array<i64: 1, 1>, scalar_prefetch = 0 : i64, scratch_operands = 0 : i64, tpu.core_type = #tpu.core_type<tc>, window_params = [{transform_indices = @transform_0, window_bounds = array<i64: 16, 32>}, {transform_indices = @transform_1, window_bounds = array<i64: 32, 64>}, {transform_indices = @transform_2, window_bounds = array<i64: 1, 64>}, {transform_indices = @transform_3, window_bounds = array<i64: 16, 64>}]} {
    %c0 = arith.constant 0 : index
    %c0_0 = arith.constant 0 : index
    %0 = vector.load %arg2[%c0, %c0_0] : memref<16x32xbf16, #tpu.memory_space<vmem>>, vector<16x32xbf16>
    %c0_1 = arith.constant 0 : index
    %c0_2 = arith.constant 0 : index
    %1 = vector.load %arg3[%c0_1, %c0_2] : memref<32x64xbf16, #tpu.memory_space<vmem>>, vector<32x64xbf16>
    %cst = arith.constant dense<0.000000e+00> : vector<16x64xf32>
    %2 = tpu.matmul %0, %1, %cst {dimension_numbers = #tpu.dot_dimension_numbers<[1], [0], [0], [1], [0, 0, 1, 1], [], []>} : vector<16x32xbf16>, vector<32x64xbf16>, vector<16x64xf32> -> vector<16x64xf32>
    %c0_3 = arith.constant 0 : index
    %c0_4 = arith.constant 0 : index
    %3 = vector.load %arg4[%c0_3, %c0_4] : memref<1x64xf32, #tpu.memory_space<vmem>>, vector<1x64xf32>
    %4 = vector.broadcast %3 : vector<1x64xf32> to vector<16x64xf32>
    %5 = arith.addf %2, %4 : vector<16x64xf32>
    %cst_5 = arith.constant 5.000000e-01 : f32
    %6 = vector.broadcast %cst_5 : f32 to vector<16x64xf32>
    %7 = arith.mulf %6, %5 : vector<16x64xf32>
    %8 = arith.mulf %5, %5 : vector<16x64xf32>
    %9 = arith.mulf %8, %5 : vector<16x64xf32>
    %cst_6 = arith.constant 4.471500e-02 : f32
    %10 = vector.broadcast %cst_6 : f32 to vector<16x64xf32>
    %11 = arith.mulf %10, %9 : vector<16x64xf32>
    %12 = arith.addf %5, %11 : vector<16x64xf32>
    %cst_7 = arith.constant 0.797884583 : f32
    %13 = vector.broadcast %cst_7 : f32 to vector<16x64xf32>
    %14 = arith.mulf %13, %12 : vector<16x64xf32>
    %15 = math.tanh %14 : vector<16x64xf32>
    %cst_8 = arith.constant 1.000000e+00 : f32
    %16 = vector.broadcast %cst_8 : f32 to vector<16x64xf32>
    %17 = arith.addf %16, %15 : vector<16x64xf32>
    %18 = arith.mulf %7, %17 : vector<16x64xf32>
    %19 = arith.truncf %18 : vector<16x64xf32> to vector<16x64xbf16>
    %c0_9 = arith.constant 0 : index
    %c0_10 = arith.constant 0 : index
    %20 = vector.load %arg5[%c0_9, %c0_10] : memref<16x64xbf16, #tpu.memory_space<vmem>>, vector<16x64xbf16>
    tpu.vector_store %arg5[%c0_9, %c0_10], %19 {strides = array<i32>} : memref<16x64xbf16, #tpu.memory_space<vmem>>, vector<16x64xbf16>,
    return
  }
  func.func @transform_0(%arg0: i32, %arg1: i32) -> (i32, i32) {
    %c0_i32 = arith.constant 0 : i32
    %c0_i32_0 = arith.constant 0 : i32
    return %arg0, %c0_i32 : i32, i32
  }
  func.func @transform_1(%arg0: i32, %arg1: i32) -> (i32, i32) {
    %c0_i32 = arith.constant 0 : i32
    %c0_i32_0 = arith.constant 0 : i32
    return %c0_i32, %arg1 : i32, i32
  }
  func.func @transform_2(%arg0: i32, %arg1: i32) -> (i32, i32) {
    %c0_i32 = arith.constant 0 : i32
    %c0_i32_0 = arith.constant 0 : i32
    return %c0_i32, %arg1 : i32, i32
  }
  func.func @transform_3(%arg0: i32, %arg1: i32) -> (i32, i32) {
    %c0_i32 = arith.constant 0 : i32
    return %arg0, %arg1 : i32, i32
  }
}

module attributes {stable_mosaic.version = 11 : i64} {
  func.func @_linear_kernel(%arg0: i32, %arg1: i32, %arg2: memref<16x64xbf16, #tpu.memory_space<vmem>>, %arg3: memref<64x32xbf16, #tpu.memory_space<vmem>>, %arg4: memref<1x32xf32, #tpu.memory_space<vmem>>, %arg5: memref<16x32xf32, #tpu.memory_space<vmem>>) attributes {dimension_semantics = [#tpu.dimension_semantics<parallel>, #tpu.dimension_semantics<parallel>], iteration_bounds = array<i64: 1, 1>, scalar_prefetch = 0 : i64, scratch_operands = 0 : i64, tpu.core_type = #tpu.core_type<tc>, window_params = [{transform_indices = @transform_0, window_bounds = array<i64: 16, 64>}, {transform_indices = @transform_1, window_bounds = array<i64: 64, 32>}, {transform_indices = @transform_2, window_bounds = array<i64: 1, 32>}, {transform_indices = @transform_3, window_bounds = array<i64: 16, 32>}]} {
    %c0 = arith.constant 0 : index
    %c0_0 = arith.constant 0 : index
    %0 = vector.load %arg2[%c0, %c0_0] : memref<16x64xbf16, #tpu.memory_space<vmem>>, vector<16x64xbf16>
    %c0_1 = arith.constant 0 : index
    %c0_2 = arith.constant 0 : index
    %1 = vector.load %arg3[%c0_1, %c0_2] : memref<64x32xbf16, #tpu.memory_space<vmem>>, vector<64x32xbf16>
    %cst = arith.constant dense<0.000000e+00> : vector<16x32xf32>
    %2 = tpu.matmul %0, %1, %cst {dimension_numbers = #tpu.dot_dimension_numbers<[1], [0], [0], [1], [0, 0, 1, 1], [], []>} : vector<16x64xbf16>, vector<64x32xbf16>, vector<16x32xf32> -> vector<16x32xf32>
    %c0_3 = arith.constant 0 : index
    %c0_4 = arith.constant 0 : index
    %3 = vector.load %arg4[%c0_3, %c0_4] : memref<1x32xf32, #tpu.memory_space<vmem>>, vector<1x32xf32>
    %4 = vector.broadcast %3 : vector<1x32xf32> to vector<16x32xf32>
    %5 = arith.addf %2, %4 : vector<16x32xf32>
    %c0_5 = arith.constant 0 : index
    %c0_6 = arith.constant 0 : index
    %6 = vector.load %arg5[%c0_5, %c0_6] : memref<16x32xf32, #tpu.memory_space<vmem>>, vector<16x32xf32>
    tpu.vector_store %arg5[%c0_5, %c0_6], %5 {strides = array<i32>} : memref<16x32xf32, #tpu.memory_space<vmem>>, vector<16x32xf32>,
    return
  }
  func.func @transform_0(%arg0: i32, %arg1: i32) -> (i32, i32) {
    %c0_i32 = arith.constant 0 : i32
    %c0_i32_0 = arith.constant 0 : i32
    return %arg0, %c0_i32 : i32, i32
  }
  func.func @transform_1(%arg0: i32, %arg1: i32) -> (i32, i32) {
    %c0_i32 = arith.constant 0 : i32
    %c0_i32_0 = arith.constant 0 : i32
    return %c0_i32, %arg1 : i32, i32
  }
  func.func @transform_2(%arg0: i32, %arg1: i32) -> (i32, i32) {
    %c0_i32 = arith.constant 0 : i32
    %c0_i32_0 = arith.constant 0 : i32
    return %c0_i32, %arg1 : i32, i32
  }
  func.func @transform_3(%arg0: i32, %arg1: i32) -> (i32, i32) {
    %c0_i32 = arith.constant 0 : i32
    return %arg0, %arg1 : i32, i32
  }
}

</mosaic_0001>

<llo_original>
// kernel: attention_layer_forward.7
$region0: #{attention_layer_forward.7}
  #allocation0 [shape = 'u32[]', space=smem, size = 0x4, offset = 0x4, fixed_abs, tag = 'smem constant byte address 0x4 - core index']
  #allocation1 [shape = 'u32[144,128]{1,0:T(1,128)}', space=vmem, size = 0x12000, scoped, tag = 'internal scratch']
  %s0 = inlined_call_operand.vmem [shape: bf16[16,32], index: 0, kind: input, shape index: {}]
  %s1 = inlined_call_operand.vmem [shape: bf16[32,96], index: 1, kind: input, shape index: {}]
  %s2 = inlined_call_operand.vmem [shape: f32[1,96], index: 2, kind: input, shape index: {}]
  %s3 = inlined_call_operand.vmem [shape: bf16[16,96], index: 3, kind: output, shape index: {}]
  %s4 = sld [smem:[#allocation0]]
  $region22: #{attention_layer_forward.7} parent=0
    _
  %s6 = ssub.s32 1, %s4
  %s7 = scalar_select 0, %s6, %s4
  // Predicated region
  $region2: #{attention_layer_forward.7} parent=0 // pred_check
    _
  $region3: #{attention_layer_forward.7} parent=0 // pred_check_branch
    %9 = sbr.rel (0) target = $region5
  $region4: #{attention_layer_forward.7} parent=0 // pred_region
    _
  $region5: #{attention_layer_forward.7} parent=0 // pred_fallthru
    _
  // Predicated region
  $region6: #{attention_layer_forward.7} parent=0 // pred_check
    _
  $region7: #{attention_layer_forward.7} parent=0 // pred_check_branch
    %11 = sbr.rel (0) target = $region9
  $region8: #{attention_layer_forward.7} parent=0 // pred_region
    _
  $region9: #{attention_layer_forward.7} parent=0 // pred_fallthru
    _
  // Predicated region
  $region10: #{attention_layer_forward.7} parent=0 // pred_check
    _
  $region11: #{attention_layer_forward.7} parent=0 // pred_check_branch
    %13 = sbr.rel (0) target = $region13
  $region12: #{attention_layer_forward.7} parent=0 // pred_region
    _
  $region13: #{attention_layer_forward.7} parent=0 // pred_fallthru
    _
  %v15 = vld [vmem:[%s0] sm:$0xf]
  %v16 = vld [vmem:[%s0 + $0x4] sm:$0xf]
  %v17 = vld [vmem:[%s1] sm:$0xf]
  %v18 = vld [vmem:[%s1 + $0x4] sm:$0xf]
  %v19 = vld [vmem:[%s1 + $0x8] sm:$0xf]
  %v20 = vld [vmem:[%s1 + $0xc] sm:$0xf]
  %v21 = vld [vmem:[%s2] sm:$0x1]
  %v23 = vlaneseq
  %v24 = vshrl.u32 %v23, 7
  %v25 = vsub.s32 0, %v24
  %v26 = vrot.slane %v21, %v25
  %v30 = vunpack.c.l.b16 %v15
  %v31 = vunpack.c.l.b16 %v16
  %v32 = vpack.c.b16 %v31, %v30
  %v37 = vunpack.c.l.b16 %v17
  %v38 = vunpack.c.l.b16 %v18
  %v39 = vunpack.c.l.b16 %v19
  %v40 = vunpack.c.l.b16 %v20
  %v41 = vpack.c.b16 %v38, %v37
  %v42 = vpack.c.b16 %v40, %v39
  %vm45 = vcmask 261120
  %v47 = vsel %vm45, %v32, 0
  %49 = vmatprep.subr.bf16.mxu0 0
  %50 = vmatpush1.bf16.msra.mxu0 %v41
  %51 = vmatprep.subr.bf16.mxu0 0
  %52 = vmatpush1.bf16.msra.mxu0 %v42
  %53 = vmatprep.subr.bf16.mxu0 0
  %54 = vmatpush1.bf16.msra.mxu0 0
  %55 = vmatprep.subr.bf16.mxu0 0
  %56 = vmatpush1.bf16.msra.mxu0 0
  %57 = vmatprep.subr.bf16.mxu0 0
  %58 = vmatpush1.bf16.msra.mxu0 0
  %59 = vmatprep.subr.bf16.mxu0 0
  %60 = vmatpush1.bf16.msra.mxu0 0
  %61 = vmatprep.subr.bf16.mxu0 0
  %62 = vmatpush1.bf16.msra.mxu0 0
  %63 = vmatprep.subr.bf16.mxu0 0
  %64 = vmatpush1.bf16.msra.mxu0 0
  %65 = vmatprep.subr.bf16.mxu0 0
  %66 = vmatpush1.bf16.msra.mxu0 0
  %67 = vmatprep.subr.bf16.mxu0 0
  %68 = vmatpush1.bf16.msra.mxu0 0
  %69 = vmatprep.subr.bf16.mxu0 0
  %70 = vmatpush1.bf16.msra.mxu0 0
  %71 = vmatprep.subr.bf16.mxu0 0
  %72 = vmatpush1.bf16.msra.mxu0 0
  %73 = vmatprep.subr.bf16.mxu0 0
  %74 = vmatpush1.bf16.msra.mxu0 0
  %75 = vmatprep.subr.bf16.mxu0 0
  %76 = vmatpush1.bf16.msra.mxu0 0
  %77 = vmatprep.subr.bf16.mxu0 0
  %78 = vmatpush1.bf16.msra.mxu0 0
  %79 = vmatprep.subr.bf16.mxu0 0
  %80 = vmatpush1.bf16.msra.mxu0 0
  %81 = vmatprep.mubr.bf16.mxu0 0
  %82 = vmatmul.mubr.bf16.gmra.mrb[0].mxu0 %v47
  %v83 = vpop.f32.mrb[0].mxu0
  %v84 = vadd.f32 %v26, %v83
  %v85 = vpop.f32.mrb[0].mxu0
  %v86 = vpop.f32.mrb[0].mxu0
  %v87 = vadd.f32 %v26, %v86
  %v88 = vpop.f32.mrb[0].mxu0
  %89 = vdwg.mxu0
  %v90 = vpack.c.bf16 %v87, %v84
  %v92 = vunpack.c.l.b16 %v90
  %v93 = vunpack.c.h.b16 %v90
  %v94 = vpack.c.b16 %v92, %v92
  %v95 = vpack.c.b16 %v93, %v93
  %vm98 = vcmask 781312
  %99 = vst.msk [vmem:[%s3] sm:$0xf] %vm98, %v94
  %100 = vst.msk [vmem:[%s3 + $0x4] sm:$0xf] %vm98, %v95
  // Predicated region
  $region14: #{attention_layer_forward.7} parent=0 // pred_check
    _
  $region15: #{attention_layer_forward.7} parent=0 // pred_check_branch
    %102 = sbr.rel (0) target = $region17
  $region16: #{attention_layer_forward.7} parent=0 // pred_region
    _
  $region17: #{attention_layer_forward.7} parent=0 // pred_fallthru
    _
  // Predicated region
  $region18: #{attention_layer_forward.7} parent=0 // pred_check
    _
  $region19: #{attention_layer_forward.7} parent=0 // pred_check_branch
    %104 = sbr.rel (0) target = $region21
  $region20: #{attention_layer_forward.7} parent=0 // pred_region
    _
  $region21: #{attention_layer_forward.7} parent=0 // pred_fallthru
    _

// kernel: attention_layer_forward.8
$region0: #{attention_layer_forward.8}
  #allocation0 [shape = 'u32[]', space=smem, size = 0x4, offset = 0x4, fixed_abs, tag = 'smem constant byte address 0x4 - core index']
  #allocation1 [shape = 'u32[144,128]{1,0:T(1,128)}', space=vmem, size = 0x12000, scoped, tag = 'internal scratch']
  %s0 = inlined_call_operand.vmem [shape: bf16[2,8,96], index: 0, kind: input, shape index: {}, may-alias: {0,1,2}]
  %s1 = inlined_call_operand.vmem [shape: bf16[2,8,96], index: 1, kind: input, shape index: {}, may-alias: {0,1,2}]
  %s2 = inlined_call_operand.vmem [shape: bf16[2,8,96], index: 2, kind: input, shape index: {}, may-alias: {0,1,2}]
  %s3 = inlined_call_operand.vmem [shape: bf16[2,8,32], index: 3, kind: output, shape index: {}]
  %s4 = sld [smem:[#allocation0]]
  $region45: #{attention_layer_forward.8} parent=0
    _
  %s6 = ssub.s32 1, %s4
  %s7 = scalar_select 0, %s6, %s4
  loop: start=0, step=1, limit=4
  $region2: #{attention_layer_forward.8} parent=0 // loop_pre_header
    _
  $region3: #{attention_layer_forward.8} parent=0 // loop_header
    %s9 = sphi 0, %s13
    %p10 = scmp.ge.s32.totalorder %s9, 4
    %s16 = sphi 0, %s28
    %s17 = sphi 0, %s24
    %s18 = sphi 0, %s16
    %s19 = sphi 0, %s17
    %s20 = sphi 0, %s18
    %s21 = sphi 0, %s19
    %s31 = sphi 0, %s33
    %s34 = sphi 0, %s31
    %s35 = sphi 0, %s34
    %s51 = sphi 0, %s35
    %s57 = sphi 0, %s59
    %s60 = sphi 0, %s57
    %s61 = sphi 0, %s60
    %s77 = sphi 0, %s61
    %s83 = sphi 0, %s85
    %s86 = sphi 0, %s83
    %s87 = sphi 0, %s86
    %s103 = sphi 0, %s87
    %s111 = sphi 0, %s113
    %s114 = sphi 0, %s111
    %s115 = sphi 0, %s114
    %s131 = sphi 0, %s115
  $region4: #{attention_layer_forward.8} parent=0 // loop_header_branch
    %12 = sbr.rel (%p10) target = $region8
  $region5: #{attention_layer_forward.8} parent=0 // loop_body
    %s14 = ssub.s32 %s9, 1
    %s15 = ssub.s32 %s9, 2
    %s22 = sadd.s32 1, %s17
    %p23 = scmp.ge.s32.totalorder %s22, 1
    %s24 = scalar_select %p23, 0, %s22
    %s25 = sadd.s32 1, %s16
    %s26 = scalar_select %p23, %s25, %s16
    %p27 = scmp.ge.s32.totalorder %s26, 2
    %s28 = scalar_select %p27, 0, %s26
    %s29 = ssub.s32 %s16, %s28
    %p30 = scmp.eq.s32.totalorder %s29, 0
    %s32 = sadd.s32 %s31, 1
    %s33 = scalar_select %p30, %s31, %s32
    %p36 = pneg %p30
    %p37 = scmp.eq.s32.totalorder %s9, 1
    %p38 = por %p36, %p37
    %p39 = scmp.ne.s32.totalorder %s31, %s34
    %p40 = scmp.eq.s32.totalorder %s9, 0
    %p41 = por %p39, %p40
    %p42 = scmp.ne.s32.totalorder %s31, %s34
    %p43 = scmp.eq.s32.totalorder %s14, 1
    %p44 = por %p42, %p43
    %p45 = scmp.ne.s32.totalorder %s34, %s35
    %p46 = scmp.eq.s32.totalorder %s14, 0
    %p47 = por %p45, %p46
    %p48 = scmp.ne.s32.totalorder %s34, %s35
    %p49 = scmp.eq.s32.totalorder %s15, 1
    %p50 = por %p48, %p49
    %p52 = scmp.ne.s32.totalorder %s35, %s51
    %p53 = scmp.eq.s32.totalorder %s15, 0
    %p54 = por %p52, %p53
    %s55 = ssub.s32 %s16, %s28
    %p56 = scmp.eq.s32.totalorder %s55, 0
    %s58 = sadd.s32 %s57, 1
    %s59 = scalar_select %p56, %s57, %s58
    %p62 = pneg %p56
    %p63 = scmp.eq.s32.totalorder %s9, 1
    %p64 = por %p62, %p63
    %p65 = scmp.ne.s32.totalorder %s57, %s60
    %p66 = scmp.eq.s32.totalorder %s9, 0
    %p67 = por %p65, %p66
    %p68 = scmp.ne.s32.totalorder %s57, %s60
    %p69 = scmp.eq.s32.totalorder %s14, 1
    %p70 = por %p68, %p69
    %p71 = scmp.ne.s32.totalorder %s60, %s61
    %p72 = scmp.eq.s32.totalorder %s14, 0
    %p73 = por %p71, %p72
    %p74 = scmp.ne.s32.totalorder %s60, %s61
    %p75 = scmp.eq.s32.totalorder %s15, 1
    %p76 = por %p74, %p75
    %p78 = scmp.ne.s32.totalorder %s61, %s77
    %p79 = scmp.eq.s32.totalorder %s15, 0
    %p80 = por %p78, %p79
    %s81 = ssub.s32 %s16, %s28
    %p82 = scmp.eq.s32.totalorder %s81, 0
    %s84 = sadd.s32 %s83, 1
    %s85 = scalar_select %p82, %s83, %s84
    %p88 = pneg %p82
    %p89 = scmp.eq.s32.totalorder %s9, 1
    %p90 = por %p88, %p89
    %p91 = scmp.ne.s32.totalorder %s83, %s86
    %p92 = scmp.eq.s32.totalorder %s9, 0
    %p93 = por %p91, %p92
    %p94 = scmp.ne.s32.totalorder %s83, %s86
    %p95 = scmp.eq.s32.totalorder %s14, 1
    %p96 = por %p94, %p95
    %p97 = scmp.ne.s32.totalorder %s86, %s87
    %p98 = scmp.eq.s32.totalorder %s14, 0
    %p99 = por %p97, %p98
    %p100 = scmp.ne.s32.totalorder %s86, %s87
    %p101 = scmp.eq.s32.totalorder %s15, 1
    %p102 = por %p100, %p101
    %p104 = scmp.ne.s32.totalorder %s87, %s103
    %p105 = scmp.eq.s32.totalorder %s15, 0
    %p106 = por %p104, %p105
    %s107 = ssub.s32 %s16, %s28
    %s108 = ssub.s32 %s17, %s24
    %s109 = sor.u32 %s107, %s108
    %p110 = scmp.eq.s32.totalorder %s109, 0
    %s112 = sadd.s32 %s111, 1
    %s113 = scalar_select %p110, %s111, %s112
    %p116 = pneg %p110
    %p117 = scmp.eq.s32.totalorder %s9, 1
    %p118 = por %p116, %p117
    %p119 = scmp.ne.s32.totalorder %s111, %s114
    %p120 = scmp.eq.s32.totalorder %s9, 0
    %p121 = por %p119, %p120
    %p122 = scmp.ne.s32.totalorder %s111, %s114
    %p123 = scmp.eq.s32.totalorder %s14, 1
    %p124 = por %p122, %p123
    %p125 = scmp.ne.s32.totalorder %s114, %s115
    %p126 = scmp.eq.s32.totalorder %s14, 0
    %p127 = por %p125, %p126
    %p128 = scmp.ne.s32.totalorder %s114, %s115
    %p129 = scmp.eq.s32.totalorder %s15, 1
    %p130 = por %p128, %p129
    %p132 = scmp.ne.s32.totalorder %s115, %s131
    %p133 = scmp.eq.s32.totalorder %s15, 0
    %p134 = por %p132, %p133
    %p135 = scmp.le.s32.totalorder 1, %s9
    %p136 = scmp.lt.s32.totalorder %s9, 3
    %p137 = pnand %p135, %p136
    %p138 = pneg %p137
    // Predicated region
    $region9: #{attention_layer_forward.8} parent=5 // pred_check
      _
    $region10: #{attention_layer_forward.8} parent=5 // pred_check_branch
      %140 = sbr.rel (%p137) target = $region12
    $region11: #{attention_layer_forward.8} parent=5 // pred_region
      %s141 = ssub.s32 %s9, 1
    $region12: #{attention_layer_forward.8} parent=5 // pred_fallthru
      _
    %p142 = scmp.lt.s32.totalorder %s9, 2
    // Predicated region
    $region13: #{attention_layer_forward.8} parent=5 // pred_check
      %p143 = pneg %p142
    $region14: #{attention_layer_forward.8} parent=5 // pred_check_branch
      %145 = sbr.rel (%p143) target = $region16
    $region15: #{attention_layer_forward.8} parent=5 // pred_region
      // Predicated region
      $region17: #{attention_layer_forward.8} parent=15 // pred_check
        %p146 = pneg %p41
      $region18: #{attention_layer_forward.8} parent=15 // pred_check_branch
        %148 = sbr.rel (%p146) target = $region20
      $region19: #{attention_layer_forward.8} parent=15 // pred_region
        %p149 = scmp.lt.s32.totalorder %s16, 1
        %s150 = scalar_select %p149, %s16, 1
        %s151 = smul.addr %s150, 4
        %s152 = scalar_lea.vmem %s0, %s151
      $region20: #{attention_layer_forward.8} parent=15 // pred_fallthru
        _
      // Predicated region
      $region21: #{attention_layer_forward.8} parent=15 // pred_check
        %p153 = pneg %p67
      $region22: #{attention_layer_forward.8} parent=15 // pred_check_branch
        %155 = sbr.rel (%p153) target = $region24
      $region23: #{attention_layer_forward.8} parent=15 // pred_region
        %p156 = scmp.lt.s32.totalorder %s16, 1
        %s157 = scalar_select %p156, %s16, 1
        %s158 = smul.addr %s157, 4
        %s159 = scalar_lea.vmem %s1, %s158
      $region24: #{attention_layer_forward.8} parent=15 // pred_fallthru
        _
      // Predicated region
      $region25: #{attention_layer_forward.8} parent=15 // pred_check
        %p160 = pneg %p93
      $region26: #{attention_layer_forward.8} parent=15 // pred_check_branch
        %162 = sbr.rel (%p160) target = $region28
      $region27: #{attention_layer_forward.8} parent=15 // pred_region
        %p163 = scmp.lt.s32.totalorder %s16, 1
        %s164 = scalar_select %p163, %s16, 1
        %s165 = smul.addr %s164, 4
        %s166 = scalar_lea.vmem %s2, %s165
      $region28: #{attention_layer_forward.8} parent=15 // pred_fallthru
        _
    $region16: #{attention_layer_forward.8} parent=5 // pred_fallthru
      _
    %p167 = scmp.le.s32.totalorder 1, %s9
    %p168 = scmp.lt.s32.totalorder %s9, 3
    %p169 = pnand %p167, %p168
    %p170 = pneg %p169
    // Predicated region
    $region29: #{attention_layer_forward.8} parent=5 // pred_check
      _
    $region30: #{attention_layer_forward.8} parent=5 // pred_check_branch
      %172 = sbr.rel (%p169) target = $region32
    $region31: #{attention_layer_forward.8} parent=5 // pred_region
      %s173 = ssub.s32 %s9, 1
      %p174 = scmp.lt.s32.totalorder %s18, 1
      %s175 = scalar_select %p174, %s18, 1
      %s176 = smul.addr %s175, 4
      %s177 = scalar_lea.vmem %s0, %s176
      %p178 = pneg %p47
      %p179 = pneg %p44
      %p180 = scmp.lt.s32.totalorder %s18, 1
      %s181 = scalar_select %p180, %s18, 1
      %s182 = smul.addr %s181, 4
      %s183 = scalar_lea.vmem %s1, %s182
      %p184 = pneg %p73
      %p185 = pneg %p70
      %p186 = scmp.lt.s32.totalorder %s18, 1
      %s187 = scalar_select %p186, %s18, 1
      %s188 = smul.addr %s187, 4
      %s189 = scalar_lea.vmem %s2, %s188
      %p190 = pneg %p99
      %p191 = pneg %p96
      %p192 = pneg %p127
      %p193 = pneg %p124
      %p194 = scmp.lt.s32.totalorder %s18, 1
      %s195 = scalar_select %p194, %s18, 1
      %p196 = scmp.lt.s32.totalorder %s19, 0
      %s197 = scalar_select %p196, %s19, 0
      %s198 = sadd.s32 %s197, %s195
      %s199 = smul.addr %s198, 4
      %s200 = scalar_lea.vmem %s3, %s199
      %p201 = scmp.lt.s32.totalorder %s18, 1
      %s202 = scalar_select %p201, %s18, 1
      %s203 = smul.addr %s202, 4
      %s204 = scalar_lea.vmem %s0, %s203
      %p205 = scmp.lt.s32.totalorder %s18, 1
      %s206 = scalar_select %p205, %s18, 1
      %s207 = smul.addr %s206, 4
      %s208 = scalar_lea.vmem %s1, %s207
      %p209 = scmp.lt.s32.totalorder %s18, 1
      %s210 = scalar_select %p209, %s18, 1
      %s211 = smul.addr %s210, 4
      %s212 = scalar_lea.vmem %s2, %s211
      %p213 = scmp.lt.s32.totalorder %s18, 1
      %s214 = scalar_select %p213, %s18, 1
      %p215 = scmp.lt.s32.totalorder %s19, 0
      %s216 = scalar_select %p215, %s19, 0
      %s217 = sadd.s32 %s216, %s214
      %s218 = smul.addr %s217, 4
      %s219 = scalar_lea.vmem %s3, %s218
      %v221 = vld [vmem:[%s204] sm:$0xf]
      %v222 = vld [vmem:[%s208] sm:$0xf]
      %v223 = vld [vmem:[%s212] sm:$0xf]
      %v225 = vunpack.c.l.b16 %v222
      %v226 = vpack.c.b16 %v225, %v225
      %227 = vrot.lane.b32.xlu0 %v226, 96
      %v228 = vpop.permute.xlu0 %227
      %vm229 = vcmask 64512
      %v231 = vsel %vm229, %v221, 0
      %v234 = vsel %vm229, %v228, 0
      %236 = vmatprep.subr.bf16.mxu0 0
      %237 = vmatpush1.bf16.xpose.msra.mxu0 %v234
      %238 = vmatprep.subr.bf16.mxu0 0
      %239 = vmatpush1.bf16.xpose.msra.mxu0 0
      %240 = vmatprep.subr.bf16.mxu0 0
      %241 = vmatpush1.bf16.xpose.msra.mxu0 0
      %242 = vmatprep.subr.bf16.mxu0 0
      %243 = vmatpush1.bf16.xpose.msra.mxu0 0
      %244 = vmatprep.subr.bf16.mxu0 0
      %245 = vmatpush1.bf16.xpose.msra.mxu0 0
      %246 = vmatprep.subr.bf16.mxu0 0
      %247 = vmatpush1.bf16.xpose.msra.mxu0 0
      %248 = vmatprep.subr.bf16.mxu0 0
      %249 = vmatpush1.bf16.xpose.msra.mxu0 0
      %250 = vmatprep.subr.bf16.mxu0 0
      %251 = vmatpush1.bf16.xpose.msra.mxu0 0
      %252 = vmatprep.subr.bf16.mxu0 0
      %253 = vmatpush1.bf16.xpose.msra.mxu0 0
      %254 = vmatprep.subr.bf16.mxu0 0
      %255 = vmatpush1.bf16.xpose.msra.mxu0 0
      %256 = vmatprep.subr.bf16.mxu0 0
      %257 = vmatpush1.bf16.xpose.msra.mxu0 0
      %258 = vmatprep.subr.bf16.mxu0 0
      %259 = vmatpush1.bf16.xpose.msra.mxu0 0
      %260 = vmatprep.subr.bf16.mxu0 0
      %261 = vmatpush1.bf16.xpose.msra.mxu0 0
      %262 = vmatprep.subr.bf16.mxu0 0
      %263 = vmatpush1.bf16.xpose.msra.mxu0 0
      %264 = vmatprep.subr.bf16.mxu0 0
      %265 = vmatpush1.bf16.xpose.msra.mxu0 0
      %266 = vmatprep.subr.bf16.mxu0 0
      %267 = vmatpush1.bf16.xpose.msra.mxu0 0
      %268 = vmatprep.mubr.bf16.mxu0 0
      %269 = vmatmul.mubr.bf16.gmra.mrb[0].mxu0 %v231
      %v270 = vpop.f32.mrb[0].mxu0
      %v271 = vadd.f32 0.0, %v270
      %v272 = vpop.f32.mrb[0].mxu0
      %v273 = vpop.f32.mrb[0].mxu0
      %v274 = vpop.f32.mrb[0].mxu0
      %275 = vdwg.mxu0
      %v276 = vmul.f32 %v271, 0.35355338
      %v277 = vsel %vm229, %v276, -inf
      %278 = vmax.xlane.f32.xlu0 %v277
      %v279 = vpop.xlane.xlu0 %278
      %v280 = vsub.f32 %v276, %v279
      %v281 = vmul.f32 %v280, 1.442695
      %v282 = vpow.pop %v281
      %v283 = vsel %vm229, %v282, 0.0
      %284 = vadd.xlane.f32.xlu0 %v283
      %v285 = vpop.xlane.xlu0 %284
      %v286 = vrcp.pop %v285
      %v287 = vmul.f32 %v282, %v286
      %v288 = vpack.c.bf16 %v287, %v287
      %v290 = vunpack.c.l.b16 %v223
      %v291 = vpack.c.b16 %v290, %v290
      %292 = vrot.lane.b32.xlu0 %v291, 64
      %v293 = vpop.permute.xlu0 %292
      %v295 = vsel %vm229, %v288, 0
      %vm297 = vcmask 1043456
      %v299 = vsel %vm297, %v293, 0
      %301 = vmatprep.subr.bf16.mxu0 0
      %302 = vmatpush1.bf16.msra.mxu0 %v299
      %303 = vmatprep.subr.bf16.mxu0 0
      %304 = vmatpush1.bf16.msra.mxu0 0
      %305 = vmatprep.subr.bf16.mxu0 0
      %306 = vmatpush1.bf16.msra.mxu0 0
      %307 = vmatprep.subr.bf16.mxu0 0
      %308 = vmatpush1.bf16.msra.mxu0 0
      %309 = vmatprep.subr.bf16.mxu0 0
      %310 = vmatpush1.bf16.msra.mxu0 0
      %311 = vmatprep.subr.bf16.mxu0 0
      %312 = vmatpush1.bf16.msra.mxu0 0
      %313 = vmatprep.subr.bf16.mxu0 0
      %314 = vmatpush1.bf16.msra.mxu0 0
      %315 = vmatprep.subr.bf16.mxu0 0
      %316 = vmatpush1.bf16.msra.mxu0 0
      %317 = vmatprep.subr.bf16.mxu0 0
      %318 = vmatpush1.bf16.msra.mxu0 0
      %319 = vmatprep.subr.bf16.mxu0 0
      %320 = vmatpush1.bf16.msra.mxu0 0
      %321 = vmatprep.subr.bf16.mxu0 0
      %322 = vmatpush1.bf16.msra.mxu0 0
      %323 = vmatprep.subr.bf16.mxu0 0
      %324 = vmatpush1.bf16.msra.mxu0 0
      %325 = vmatprep.subr.bf16.mxu0 0
      %326 = vmatpush1.bf16.msra.mxu0 0
      %327 = vmatprep.subr.bf16.mxu0 0
      %328 = vmatpush1.bf16.msra.mxu0 0
      %329 = vmatprep.subr.bf16.mxu0 0
      %330 = vmatpush1.bf16.msra.mxu0 0
      %331 = vmatprep.subr.bf16.mxu0 0
      %332 = vmatpush1.bf16.msra.mxu0 0
      %333 = vmatprep.mubr.bf16.mxu0 0
      %334 = vmatmul.mubr.bf16.gmra.mrb[0].mxu0 %v295
      %v335 = vpop.f32.mrb[0].mxu0
      %v336 = vadd.f32 0.0, %v335
      %v337 = vpop.f32.mrb[0].mxu0
      %v338 = vpop.f32.mrb[0].mxu0
      %v339 = vpop.f32.mrb[0].mxu0
      %340 = vdwg.mxu0
      %v342 = vunpack.c.l.b16 %v221
      %v343 = vpack.c.b16 %v342, %v342
      %344 = vrot.lane.b32.xlu0 %v343, 120
      %v345 = vpop.permute.xlu0 %344
      %346 = vrot.lane.b32.xlu0 %v226, 88
      %v347 = vpop.permute.xlu0 %346
      %v349 = vsel %vm229, %v345, 0
      %v352 = vsel %vm229, %v347, 0
      %354 = vmatprep.subr.bf16.mxu0 0
      %355 = vmatpush1.bf16.xpose.msra.mxu0 %v352
      %356 = vmatprep.subr.bf16.mxu0 0
      %357 = vmatpush1.bf16.xpose.msra.mxu0 0
      %358 = vmatprep.subr.bf16.mxu0 0
      %359 = vmatpush1.bf16.xpose.msra.mxu0 0
      %360 = vmatprep.subr.bf16.mxu0 0
      %361 = vmatpush1.bf16.xpose.msra.mxu0 0
      %362 = vmatprep.subr.bf16.mxu0 0
      %363 = vmatpush1.bf16.xpose.msra.mxu0 0
      %364 = vmatprep.subr.bf16.mxu0 0
      %365 = vmatpush1.bf16.xpose.msra.mxu0 0
      %366 = vmatprep.subr.bf16.mxu0 0
      %367 = vmatpush1.bf16.xpose.msra.mxu0 0
      %368 = vmatprep.subr.bf16.mxu0 0
      %369 = vmatpush1.bf16.xpose.msra.mxu0 0
      %370 = vmatprep.subr.bf16.mxu0 0
      %371 = vmatpush1.bf16.xpose.msra.mxu0 0
      %372 = vmatprep.subr.bf16.mxu0 0
      %373 = vmatpush1.bf16.xpose.msra.mxu0 0
      %374 = vmatprep.subr.bf16.mxu0 0
      %375 = vmatpush1.bf16.xpose.msra.mxu0 0
      %376 = vmatprep.subr.bf16.mxu0 0
      %377 = vmatpush1.bf16.xpose.msra.mxu0 0
      %378 = vmatprep.subr.bf16.mxu0 0
      %379 = vmatpush1.bf16.xpose.msra.mxu0 0
      %380 = vmatprep.subr.bf16.mxu0 0
      %381 = vmatpush1.bf16.xpose.msra.mxu0 0
      %382 = vmatprep.subr.bf16.mxu0 0
      %383 = vmatpush1.bf16.xpose.msra.mxu0 0
      %384 = vmatprep.subr.bf16.mxu0 0
      %385 = vmatpush1.bf16.xpose.msra.mxu0 0
      %386 = vmatprep.mubr.bf16.mxu0 0
      %387 = vmatmul.mubr.bf16.gmra.mrb[0].mxu0 %v349
      %v388 = vpop.f32.mrb[0].mxu0
      %v389 = vadd.f32 0.0, %v388
      %v390 = vpop.f32.mrb[0].mxu0
      %v391 = vpop.f32.mrb[0].mxu0
      %v392 = vpop.f32.mrb[0].mxu0
      %393 = vdwg.mxu0
      %v394 = vmul.f32 %v389, 0.35355338
      %v395 = vsel %vm229, %v394, -inf
      %396 = vmax.xlane.f32.xlu0 %v395
      %v397 = vpop.xlane.xlu0 %396
      %v398 = vsub.f32 %v394, %v397
      %v399 = vmul.f32 %v398, 1.442695
      %v400 = vpow.pop %v399
      %v401 = vsel %vm229, %v400, 0.0
      %402 = vadd.xlane.f32.xlu0 %v401
      %v403 = vpop.xlane.xlu0 %402
      %v404 = vrcp.pop %v403
      %v405 = vmul.f32 %v400, %v404
      %v406 = vpack.c.bf16 %v405, %v405
      %407 = vrot.lane.b32.xlu0 %v291, 56
      %v408 = vpop.permute.xlu0 %407
      %v410 = vsel %vm229, %v406, 0
      %v413 = vsel %vm297, %v408, 0
      %415 = vmatprep.subr.bf16.mxu0 0
      %416 = vmatpush1.bf16.msra.mxu0 %v413
      %417 = vmatprep.subr.bf16.mxu0 0
      %418 = vmatpush1.bf16.msra.mxu0 0
      %419 = vmatprep.subr.bf16.mxu0 0
      %420 = vmatpush1.bf16.msra.mxu0 0
      %421 = vmatprep.subr.bf16.mxu0 0
      %422 = vmatpush1.bf16.msra.mxu0 0
      %423 = vmatprep.subr.bf16.mxu0 0
      %424 = vmatpush1.bf16.msra.mxu0 0
      %425 = vmatprep.subr.bf16.mxu0 0
      %426 = vmatpush1.bf16.msra.mxu0 0
      %427 = vmatprep.subr.bf16.mxu0 0
      %428 = vmatpush1.bf16.msra.mxu0 0
      %429 = vmatprep.subr.bf16.mxu0 0
      %430 = vmatpush1.bf16.msra.mxu0 0
      %431 = vmatprep.subr.bf16.mxu0 0
      %432 = vmatpush1.bf16.msra.mxu0 0
      %433 = vmatprep.subr.bf16.mxu0 0
      %434 = vmatpush1.bf16.msra.mxu0 0
      %435 = vmatprep.subr.bf16.mxu0 0
      %436 = vmatpush1.bf16.msra.mxu0 0
      %437 = vmatprep.subr.bf16.mxu0 0
      %438 = vmatpush1.bf16.msra.mxu0 0
      %439 = vmatprep.subr.bf16.mxu0 0
      %440 = vmatpush1.bf16.msra.mxu0 0
      %441 = vmatprep.subr.bf16.mxu0 0
      %442 = vmatpush1.bf16.msra.mxu0 0
      %443 = vmatprep.subr.bf16.mxu0 0
      %444 = vmatpush1.bf16.msra.mxu0 0
      %445 = vmatprep.subr.bf16.mxu0 0
      %446 = vmatpush1.bf16.msra.mxu0 0
      %447 = vmatprep.mubr.bf16.mxu0 0
      %448 = vmatmul.mubr.bf16.gmra.mrb[0].mxu0 %v410
      %v449 = vpop.f32.mrb[0].mxu0
      %v450 = vadd.f32 0.0, %v449
      %v451 = vpop.f32.mrb[0].mxu0
      %v452 = vpop.f32.mrb[0].mxu0
      %v453 = vpop.f32.mrb[0].mxu0
      %454 = vdwg.mxu0
      %455 = vrot.lane.b32.xlu0 %v343, 112
      %v456 = vpop.permute.xlu0 %455
      %457 = vrot.lane.b32.xlu0 %v226, 80
      %v458 = vpop.permute.xlu0 %457
      %v460 = vsel %vm229, %v456, 0
      %v463 = vsel %vm229, %v458, 0
      %465 = vmatprep.subr.bf16.mxu0 0
      %466 = vmatpush1.bf16.xpose.msra.mxu0 %v463
      %467 = vmatprep.subr.bf16.mxu0 0
      %468 = vmatpush1.bf16.xpose.msra.mxu0 0
      %469 = vmatprep.subr.bf16.mxu0 0
      %470 = vmatpush1.bf16.xpose.msra.mxu0 0
      %471 = vmatprep.subr.bf16.mxu0 0
      %472 = vmatpush1.bf16.xpose.msra.mxu0 0
      %473 = vmatprep.subr.bf16.mxu0 0
      %474 = vmatpush1.bf16.xpose.msra.mxu0 0
      %475 = vmatprep.subr.bf16.mxu0 0
      %476 = vmatpush1.bf16.xpose.msra.mxu0 0
      %477 = vmatprep.subr.bf16.mxu0 0
      %478 = vmatpush1.bf16.xpose.msra.mxu0 0
      %479 = vmatprep.subr.bf16.mxu0 0
      %480 = vmatpush1.bf16.xpose.msra.mxu0 0
      %481 = vmatprep.subr.bf16.mxu0 0
      %482 = vmatpush1.bf16.xpose.msra.mxu0 0
      %483 = vmatprep.subr.bf16.mxu0 0
      %484 = vmatpush1.bf16.xpose.msra.mxu0 0
      %485 = vmatprep.subr.bf16.mxu0 0
      %486 = vmatpush1.bf16.xpose.msra.mxu0 0
      %487 = vmatprep.subr.bf16.mxu0 0
      %488 = vmatpush1.bf16.xpose.msra.mxu0 0
      %489 = vmatprep.subr.bf16.mxu0 0
      %490 = vmatpush1.bf16.xpose.msra.mxu0 0
      %491 = vmatprep.subr.bf16.mxu0 0
      %492 = vmatpush1.bf16.xpose.msra.mxu0 0
      %493 = vmatprep.subr.bf16.mxu0 0
      %494 = vmatpush1.bf16.xpose.msra.mxu0 0
      %495 = vmatprep.subr.bf16.mxu0 0
      %496 = vmatpush1.bf16.xpose.msra.mxu0 0
      %497 = vmatprep.mubr.bf16.mxu0 0
      %498 = vmatmul.mubr.bf16.gmra.mrb[0].mxu0 %v460
      %v499 = vpop.f32.mrb[0].mxu0
      %v500 = vadd.f32 0.0, %v499
      %v501 = vpop.f32.mrb[0].mxu0
      %v502 = vpop.f32.mrb[0].mxu0
      %v503 = vpop.f32.mrb[0].mxu0
      %504 = vdwg.mxu0
      %v505 = vmul.f32 %v500, 0.35355338
      %v506 = vsel %vm229, %v505, -inf
      %507 = vmax.xlane.f32.xlu0 %v506
      %v508 = vpop.xlane.xlu0 %507
      %v509 = vsub.f32 %v505, %v508
      %v510 = vmul.f32 %v509, 1.442695
      %v511 = vpow.pop %v510
      %v512 = vsel %vm229, %v511, 0.0
      %513 = vadd.xlane.f32.xlu0 %v512
      %v514 = vpop.xlane.xlu0 %513
      %v515 = vrcp.pop %v514
      %v516 = vmul.f32 %v511, %v515
      %v517 = vpack.c.bf16 %v516, %v516
      %518 = vrot.lane.b32.xlu0 %v291, 48
      %v519 = vpop.permute.xlu0 %518
      %v521 = vsel %vm229, %v517, 0
      %v524 = vsel %vm297, %v519, 0
      %526 = vmatprep.subr.bf16.mxu0 0
      %527 = vmatpush1.bf16.msra.mxu0 %v524
      %528 = vmatprep.subr.bf16.mxu0 0
      %529 = vmatpush1.bf16.msra.mxu0 0
      %530 = vmatprep.subr.bf16.mxu0 0
      %531 = vmatpush1.bf16.msra.mxu0 0
      %532 = vmatprep.subr.bf16.mxu0 0
      %533 = vmatpush1.bf16.msra.mxu0 0
      %534 = vmatprep.subr.bf16.mxu0 0
      %535 = vmatpush1.bf16.msra.mxu0 0
      %536 = vmatprep.subr.bf16.mxu0 0
      %537 = vmatpush1.bf16.msra.mxu0 0
      %538 = vmatprep.subr.bf16.mxu0 0
      %539 = vmatpush1.bf16.msra.mxu0 0
      %540 = vmatprep.subr.bf16.mxu0 0
      %541 = vmatpush1.bf16.msra.mxu0 0
      %542 = vmatprep.subr.bf16.mxu0 0
      %543 = vmatpush1.bf16.msra.mxu0 0
      %544 = vmatprep.subr.bf16.mxu0 0
      %545 = vmatpush1.bf16.msra.mxu0 0
      %546 = vmatprep.subr.bf16.mxu0 0
      %547 = vmatpush1.bf16.msra.mxu0 0
      %548 = vmatprep.subr.bf16.mxu0 0
      %549 = vmatpush1.bf16.msra.mxu0 0
      %550 = vmatprep.subr.bf16.mxu0 0
      %551 = vmatpush1.bf16.msra.mxu0 0
      %552 = vmatprep.subr.bf16.mxu0 0
      %553 = vmatpush1.bf16.msra.mxu0 0
      %554 = vmatprep.subr.bf16.mxu0 0
      %555 = vmatpush1.bf16.msra.mxu0 0
      %556 = vmatprep.subr.bf16.mxu0 0
      %557 = vmatpush1.bf16.msra.mxu0 0
      %558 = vmatprep.mubr.bf16.mxu0 0
      %559 = vmatmul.mubr.bf16.gmra.mrb[0].mxu0 %v521
      %v560 = vpop.f32.mrb[0].mxu0
      %v561 = vadd.f32 0.0, %v560
      %v562 = vpop.f32.mrb[0].mxu0
      %v563 = vpop.f32.mrb[0].mxu0
      %v564 = vpop.f32.mrb[0].mxu0
      %565 = vdwg.mxu0
      %566 = vrot.lane.b32.xlu0 %v343, 104
      %v567 = vpop.permute.xlu0 %566
      %568 = vrot.lane.b32.xlu0 %v226, 72
      %v569 = vpop.permute.xlu0 %568
      %v571 = vsel %vm229, %v567, 0
      %v574 = vsel %vm229, %v569, 0
      %576 = vmatprep.subr.bf16.mxu0 0
      %577 = vmatpush1.bf16.xpose.msra.mxu0 %v574
      %578 = vmatprep.subr.bf16.mxu0 0
      %579 = vmatpush1.bf16.xpose.msra.mxu0 0
      %580 = vmatprep.subr.bf16.mxu0 0
      %581 = vmatpush1.bf16.xpose.msra.mxu0 0
      %582 = vmatprep.subr.bf16.mxu0 0
      %583 = vmatpush1.bf16.xpose.msra.mxu0 0
      %584 = vmatprep.subr.bf16.mxu0 0
      %585 = vmatpush1.bf16.xpose.msra.mxu0 0
      %586 = vmatprep.subr.bf16.mxu0 0
      %587 = vmatpush1.bf16.xpose.msra.mxu0 0
      %588 = vmatprep.subr.bf16.mxu0 0
      %589 = vmatpush1.bf16.xpose.msra.mxu0 0
      %590 = vmatprep.subr.bf16.mxu0 0
      %591 = vmatpush1.bf16.xpose.msra.mxu0 0
      %592 = vmatprep.subr.bf16.mxu0 0
      %593 = vmatpush1.bf16.xpose.msra.mxu0 0
      %594 = vmatprep.subr.bf16.mxu0 0
      %595 = vmatpush1.bf16.xpose.msra.mxu0 0
      %596 = vmatprep.subr.bf16.mxu0 0
      %597 = vmatpush1.bf16.xpose.msra.mxu0 0
      %598 = vmatprep.subr.bf16.mxu0 0
      %599 = vmatpush1.bf16.xpose.msra.mxu0 0
      %600 = vmatprep.subr.bf16.mxu0 0
      %601 = vmatpush1.bf16.xpose.msra.mxu0 0
      %602 = vmatprep.subr.bf16.mxu0 0
      %603 = vmatpush1.bf16.xpose.msra.mxu0 0
      %604 = vmatprep.subr.bf16.mxu0 0
      %605 = vmatpush1.bf16.xpose.msra.mxu0 0
      %606 = vmatprep.subr.bf16.mxu0 0
      %607 = vmatpush1.bf16.xpose.msra.mxu0 0
      %608 = vmatprep.mubr.bf16.mxu0 0
      %609 = vmatmul.mubr.bf16.gmra.mrb[0].mxu0 %v571
      %v610 = vpop.f32.mrb[0].mxu0
      %v611 = vadd.f32 0.0, %v610
      %v612 = vpop.f32.mrb[0].mxu0
      %v613 = vpop.f32.mrb[0].mxu0
      %v614 = vpop.f32.mrb[0].mxu0
      %615 = vdwg.mxu0
      %v616 = vmul.f32 %v611, 0.35355338
      %v617 = vsel %vm229, %v616, -inf
      %618 = vmax.xlane.f32.xlu0 %v617
      %v619 = vpop.xlane.xlu0 %618
      %v620 = vsub.f32 %v616, %v619
      %v621 = vmul.f32 %v620, 1.442695
      %v622 = vpow.pop %v621
      %v623 = vsel %vm229, %v622, 0.0
      %624 = vadd.xlane.f32.xlu0 %v623
      %v625 = vpop.xlane.xlu0 %624
      %v626 = vrcp.pop %v625
      %v627 = vmul.f32 %v622, %v626
      %v628 = vpack.c.bf16 %v627, %v627
      %629 = vrot.lane.b32.xlu0 %v291, 40
      %v630 = vpop.permute.xlu0 %629
      %v632 = vsel %vm229, %v628, 0
      %v635 = vsel %vm297, %v630, 0
      %637 = vmatprep.subr.bf16.mxu0 0
      %638 = vmatpush1.bf16.msra.mxu0 %v635
      %639 = vmatprep.subr.bf16.mxu0 0
      %640 = vmatpush1.bf16.msra.mxu0 0
      %641 = vmatprep.subr.bf16.mxu0 0
      %642 = vmatpush1.bf16.msra.mxu0 0
      %643 = vmatprep.subr.bf16.mxu0 0
      %644 = vmatpush1.bf16.msra.mxu0 0
      %645 = vmatprep.subr.bf16.mxu0 0
      %646 = vmatpush1.bf16.msra.mxu0 0
      %647 = vmatprep.subr.bf16.mxu0 0
      %648 = vmatpush1.bf16.msra.mxu0 0
      %649 = vmatprep.subr.bf16.mxu0 0
      %650 = vmatpush1.bf16.msra.mxu0 0
      %651 = vmatprep.subr.bf16.mxu0 0
      %652 = vmatpush1.bf16.msra.mxu0 0
      %653 = vmatprep.subr.bf16.mxu0 0
      %654 = vmatpush1.bf16.msra.mxu0 0
      %655 = vmatprep.subr.bf16.mxu0 0
      %656 = vmatpush1.bf16.msra.mxu0 0
      %657 = vmatprep.subr.bf16.mxu0 0
      %658 = vmatpush1.bf16.msra.mxu0 0
      %659 = vmatprep.subr.bf16.mxu0 0
      %660 = vmatpush1.bf16.msra.mxu0 0
      %661 = vmatprep.subr.bf16.mxu0 0
      %662 = vmatpush1.bf16.msra.mxu0 0
      %663 = vmatprep.subr.bf16.mxu0 0
      %664 = vmatpush1.bf16.msra.mxu0 0
      %665 = vmatprep.subr.bf16.mxu0 0
      %666 = vmatpush1.bf16.msra.mxu0 0
      %667 = vmatprep.subr.bf16.mxu0 0
      %668 = vmatpush1.bf16.msra.mxu0 0
      %669 = vmatprep.mubr.bf16.mxu0 0
      %670 = vmatmul.mubr.bf16.gmra.mrb[0].mxu0 %v632
      %v671 = vpop.f32.mrb[0].mxu0
      %v672 = vadd.f32 0.0, %v671
      %v673 = vpop.f32.mrb[0].mxu0
      %v674 = vpop.f32.mrb[0].mxu0
      %v675 = vpop.f32.mrb[0].mxu0
      %676 = vdwg.mxu0
      %678 = vrot.lane.b32.xlu0 %v450, 8
      %v679 = vpop.permute.xlu0 %678
      %682 = vrot.lane.b32.xlu0 %v561, 16
      %v683 = vpop.permute.xlu0 %682
      %686 = vrot.lane.b32.xlu0 %v672, 24
      %v687 = vpop.permute.xlu0 %686
      %v689 = vsel %vm229, %v336, %v679
      %vm690 = vcmask 130048
      %v691 = vsel %vm690, %v689, %v683
      %vm692 = vcmask 195584
      %v693 = vsel %vm692, %v691, %v687
      %v694 = vpack.c.bf16 %v693, %v693
      %vm695 = vcmask 257024
      %696 = vst.msk [vmem:[%s219] sm:$0xf] %vm695, %v694
      %p697 = scmp.lt.s32.totalorder %s18, 1
      %s698 = scalar_select %p697, %s18, 1
      %p699 = scmp.lt.s32.totalorder %s19, 0
      %s700 = scalar_select %p699, %s19, 0
      %s701 = sadd.s32 %s700, %s698
      %s702 = smul.addr %s701, 4
      %s703 = scalar_lea.vmem %s3, %s702
      // Predicated region
      $region33: #{attention_layer_forward.8} parent=31 // pred_check
        %p704 = pneg %p124
      $region34: #{attention_layer_forward.8} parent=31 // pred_check_branch
        %706 = sbr.rel (%p704) target = $region36
      $region35: #{attention_layer_forward.8} parent=31 // pred_region
        _
      $region36: #{attention_layer_forward.8} parent=31 // pred_fallthru
        _
    $region32: #{attention_layer_forward.8} parent=5 // pred_fallthru
      _
    %p707 = scmp.le.s32.totalorder 2, %s9
    // Predicated region
    $region37: #{attention_layer_forward.8} parent=5 // pred_check
      %p708 = pneg %p707
    $region38: #{attention_layer_forward.8} parent=5 // pred_check_branch
      %710 = sbr.rel (%p708) target = $region40
    $region39: #{attention_layer_forward.8} parent=5 // pred_region
      %s711 = ssub.s32 %s9, 2
      // Predicated region
      $region41: #{attention_layer_forward.8} parent=39 // pred_check
        %p712 = pneg %p130
      $region42: #{attention_layer_forward.8} parent=39 // pred_check_branch
        %714 = sbr.rel (%p712) target = $region44
      $region43: #{attention_layer_forward.8} parent=39 // pred_region
        %p715 = scmp.lt.s32.totalorder %s20, 1
        %s716 = scalar_select %p715, %s20, 1
        %p717 = scmp.lt.s32.totalorder %s21, 0
        %s718 = scalar_select %p717, %s21, 0
        %s719 = sadd.s32 %s718, %s716
        %s720 = smul.addr %s719, 4
        %s721 = scalar_lea.vmem %s3, %s720
      $region44: #{attention_layer_forward.8} parent=39 // pred_fallthru
        _
    $region40: #{attention_layer_forward.8} parent=5 // pred_fallthru
      _
  $region6: #{attention_layer_forward.8} parent=0 // loop_footer
    %s13 = sadd.s32 1, %s9
  $region7: #{attention_layer_forward.8} parent=0 // loop_footer_branch
    %8 = sbr.rel target = $region3
  $region8: #{attention_layer_forward.8} parent=0 // loop_exit
    _

// kernel: attention_layer_forward.10
$region0: #{attention_layer_forward.10}
  #allocation0 [shape = 'u32[]', space=smem, size = 0x4, offset = 0x4, fixed_abs, tag = 'smem constant byte address 0x4 - core index']
  #allocation1 [shape = 'u32[144,128]{1,0:T(1,128)}', space=vmem, size = 0x12000, scoped, tag = 'internal scratch']
  %s0 = inlined_call_operand.vmem [shape: f32[16,32], index: 0, kind: input, shape index: {}]
  %s1 = inlined_call_operand.vmem [shape: f32[16,32], index: 1, kind: input, shape index: {}]
  %s2 = inlined_call_operand.vmem [shape: f32[1,32], index: 2, kind: input, shape index: {}]
  %s3 = inlined_call_operand.vmem [shape: f32[1,32], index: 3, kind: input, shape index: {}]
  %s4 = inlined_call_operand.vmem [shape: f32[16,32], index: 4, kind: output, shape index: {}]
  %s5 = sld [smem:[#allocation0]]
  $region26: #{attention_layer_forward.10} parent=0
    _
  %s7 = ssub.s32 1, %s5
  %s8 = scalar_select 0, %s7, %s5
  // Predicated region
  $region2: #{attention_layer_forward.10} parent=0 // pred_check
    _
  $region3: #{attention_layer_forward.10} parent=0 // pred_check_branch
    %10 = sbr.rel (0) target = $region5
  $region4: #{attention_layer_forward.10} parent=0 // pred_region
    _
  $region5: #{attention_layer_forward.10} parent=0 // pred_fallthru
    _
  // Predicated region
  $region6: #{attention_layer_forward.10} parent=0 // pred_check
    _
  $region7: #{attention_layer_forward.10} parent=0 // pred_check_branch
    %12 = sbr.rel (0) target = $region9
  $region8: #{attention_layer_forward.10} parent=0 // pred_region
    _
  $region9: #{attention_layer_forward.10} parent=0 // pred_fallthru
    _
  // Predicated region
  $region10: #{attention_layer_forward.10} parent=0 // pred_check
    _
  $region11: #{attention_layer_forward.10} parent=0 // pred_check_branch
    %14 = sbr.rel (0) target = $region13
  $region12: #{attention_layer_forward.10} parent=0 // pred_region
    _
  $region13: #{attention_layer_forward.10} parent=0 // pred_fallthru
    _
  // Predicated region
  $region14: #{attention_layer_forward.10} parent=0 // pred_check
    _
  $region15: #{attention_layer_forward.10} parent=0 // pred_check_branch
    %16 = sbr.rel (0) target = $region17
  $region16: #{attention_layer_forward.10} parent=0 // pred_region
    _
  $region17: #{attention_layer_forward.10} parent=0 // pred_fallthru
    _
  %v17 = vld [vmem:[%s0] sm:$0xff]
  %v18 = vld [vmem:[%s0 + $0x8] sm:$0xff]
  %v19 = vld [vmem:[%s1] sm:$0xff]
  %v20 = vld [vmem:[%s1 + $0x8] sm:$0xff]
  %v21 = vadd.f32 %v17, %v19
  %v22 = vadd.f32 %v18, %v20
  %vm23 = vcmask 261120
  %v24 = vsel %vm23, %v21, 0.0
  %25 = vadd.xlane.f32.xlu0 %v24
  %v26 = vpop.xlane.xlu0 %25
  %v27 = vsel %vm23, %v22, 0.0
  %28 = vadd.xlane.f32.xlu0 %v27
  %v29 = vpop.xlane.xlu0 %28
  %v30 = vrcp.pop 32.0
  %v31 = vmul.f32 %v26, %v30
  %v32 = vmul.f32 %v29, %v30
  %v33 = vsub.f32 %v21, %v31
  %v34 = vsub.f32 %v22, %v32
  %v35 = vmul.f32 %v33, %v33
  %v36 = vmul.f32 %v34, %v34
  %v37 = vsel %vm23, %v35, 0.0
  %38 = vadd.xlane.f32.xlu0 %v37
  %v39 = vpop.xlane.xlu0 %38
  %v40 = vsel %vm23, %v36, 0.0
  %41 = vadd.xlane.f32.xlu0 %v40
  %v42 = vpop.xlane.xlu0 %41
  %v43 = vmul.f32 %v39, %v30
  %v44 = vmul.f32 %v42, %v30
  %v45 = vadd.f32 %v43, 1e-05
  %v46 = vadd.f32 %v44, 1e-05
  %v47 = vrsqrt.pop %v45
  %v48 = vrsqrt.pop %v46
  %v49 = vmul.f32 %v33, %v47
  %v50 = vmul.f32 %v34, %v48
  %v51 = vld [vmem:[%s2] sm:$0x1]
  %v53 = vlaneseq
  %v54 = vshrl.u32 %v53, 7
  %v55 = vsub.s32 0, %v54
  %v56 = vrot.slane %v51, %v55
  %v58 = vmul.f32 %v49, %v56
  %v59 = vmul.f32 %v50, %v56
  %v60 = vld [vmem:[%s3] sm:$0x1]
  %v62 = vlaneseq
  %v63 = vshrl.u32 %v62, 7
  %v64 = vsub.s32 0, %v63
  %v65 = vrot.slane %v60, %v64
  %v67 = vadd.f32 %v58, %v65
  %v68 = vadd.f32 %v59, %v65
  %69 = vst.msk [vmem:[%s4] sm:$0xff] %vm23, %v67
  %70 = vst.msk [vmem:[%s4 + $0x8] sm:$0xff] %vm23, %v68
  // Predicated region
  $region18: #{attention_layer_forward.10} parent=0 // pred_check
    _
  $region19: #{attention_layer_forward.10} parent=0 // pred_check_branch
    %72 = sbr.rel (0) target = $region21
  $region20: #{attention_layer_forward.10} parent=0 // pred_region
    _
  $region21: #{attention_layer_forward.10} parent=0 // pred_fallthru
    _
  // Predicated region
  $region22: #{attention_layer_forward.10} parent=0 // pred_check
    _
  $region23: #{attention_layer_forward.10} parent=0 // pred_check_branch
    %74 = sbr.rel (0) target = $region25
  $region24: #{attention_layer_forward.10} parent=0 // pred_region
    _
  $region25: #{attention_layer_forward.10} parent=0 // pred_fallthru
    _

// kernel: attention_layer_forward.9
$region0: #{attention_layer_forward.9}
  #allocation0 [shape = 'u32[]', space=smem, size = 0x4, offset = 0x4, fixed_abs, tag = 'smem constant byte address 0x4 - core index']
  #allocation1 [shape = 'u32[144,128]{1,0:T(1,128)}', space=vmem, size = 0x12000, scoped, tag = 'internal scratch']
  %s0 = inlined_call_operand.vmem [shape: bf16[16,32], index: 0, kind: input, shape index: {}]
  %s1 = inlined_call_operand.vmem [shape: bf16[32,32], index: 1, kind: input, shape index: {}]
  %s2 = inlined_call_operand.vmem [shape: f32[1,32], index: 2, kind: input, shape index: {}]
  %s3 = inlined_call_operand.vmem [shape: f32[16,32], index: 3, kind: output, shape index: {}]
  %s4 = sld [smem:[#allocation0]]
  $region22: #{attention_layer_forward.9} parent=0
    _
  %s6 = ssub.s32 1, %s4
  %s7 = scalar_select 0, %s6, %s4
  // Predicated region
  $region2: #{attention_layer_forward.9} parent=0 // pred_check
    _
  $region3: #{attention_layer_forward.9} parent=0 // pred_check_branch
    %9 = sbr.rel (0) target = $region5
  $region4: #{attention_layer_forward.9} parent=0 // pred_region
    _
  $region5: #{attention_layer_forward.9} parent=0 // pred_fallthru
    _
  // Predicated region
  $region6: #{attention_layer_forward.9} parent=0 // pred_check
    _
  $region7: #{attention_layer_forward.9} parent=0 // pred_check_branch
    %11 = sbr.rel (0) target = $region9
  $region8: #{attention_layer_forward.9} parent=0 // pred_region
    _
  $region9: #{attention_layer_forward.9} parent=0 // pred_fallthru
    _
  // Predicated region
  $region10: #{attention_layer_forward.9} parent=0 // pred_check
    _
  $region11: #{attention_layer_forward.9} parent=0 // pred_check_branch
    %13 = sbr.rel (0) target = $region13
  $region12: #{attention_layer_forward.9} parent=0 // pred_region
    _
  $region13: #{attention_layer_forward.9} parent=0 // pred_fallthru
    _
  %v15 = vld [vmem:[%s0] sm:$0xf]
  %v16 = vld [vmem:[%s0 + $0x4] sm:$0xf]
  %v17 = vld [vmem:[%s1] sm:$0xf]
  %v18 = vld [vmem:[%s1 + $0x4] sm:$0xf]
  %v19 = vld [vmem:[%s1 + $0x8] sm:$0xf]
  %v20 = vld [vmem:[%s1 + $0xc] sm:$0xf]
  %v21 = vld [vmem:[%s2] sm:$0x1]
  %v23 = vlaneseq
  %v24 = vshrl.u32 %v23, 7
  %v25 = vsub.s32 0, %v24
  %v26 = vrot.slane %v21, %v25
  %v30 = vunpack.c.l.b16 %v15
  %v31 = vunpack.c.l.b16 %v16
  %v32 = vpack.c.b16 %v31, %v30
  %v37 = vunpack.c.l.b16 %v17
  %v38 = vunpack.c.l.b16 %v18
  %v39 = vunpack.c.l.b16 %v19
  %v40 = vunpack.c.l.b16 %v20
  %v41 = vpack.c.b16 %v38, %v37
  %v42 = vpack.c.b16 %v40, %v39
  %vm45 = vcmask 261120
  %v47 = vsel %vm45, %v32, 0
  %49 = vmatprep.subr.bf16.mxu0 0
  %50 = vmatpush1.bf16.msra.mxu0 %v41
  %51 = vmatprep.subr.bf16.mxu0 0
  %52 = vmatpush1.bf16.msra.mxu0 %v42
  %53 = vmatprep.subr.bf16.mxu0 0
  %54 = vmatpush1.bf16.msra.mxu0 0
  %55 = vmatprep.subr.bf16.mxu0 0
  %56 = vmatpush1.bf16.msra.mxu0 0
  %57 = vmatprep.subr.bf16.mxu0 0
  %58 = vmatpush1.bf16.msra.mxu0 0
  %59 = vmatprep.subr.bf16.mxu0 0
  %60 = vmatpush1.bf16.msra.mxu0 0
  %61 = vmatprep.subr.bf16.mxu0 0
  %62 = vmatpush1.bf16.msra.mxu0 0
  %63 = vmatprep.subr.bf16.mxu0 0
  %64 = vmatpush1.bf16.msra.mxu0 0
  %65 = vmatprep.subr.bf16.mxu0 0
  %66 = vmatpush1.bf16.msra.mxu0 0
  %67 = vmatprep.subr.bf16.mxu0 0
  %68 = vmatpush1.bf16.msra.mxu0 0
  %69 = vmatprep.subr.bf16.mxu0 0
  %70 = vmatpush1.bf16.msra.mxu0 0
  %71 = vmatprep.subr.bf16.mxu0 0
  %72 = vmatpush1.bf16.msra.mxu0 0
  %73 = vmatprep.subr.bf16.mxu0 0
  %74 = vmatpush1.bf16.msra.mxu0 0
  %75 = vmatprep.subr.bf16.mxu0 0
  %76 = vmatpush1.bf16.msra.mxu0 0
  %77 = vmatprep.subr.bf16.mxu0 0
  %78 = vmatpush1.bf16.msra.mxu0 0
  %79 = vmatprep.subr.bf16.mxu0 0
  %80 = vmatpush1.bf16.msra.mxu0 0
  %81 = vmatprep.mubr.bf16.mxu0 0
  %82 = vmatmul.mubr.bf16.gmra.mrb[0].mxu0 %v47
  %v83 = vpop.f32.mrb[0].mxu0
  %v84 = vadd.f32 %v26, %v83
  %v85 = vpop.f32.mrb[0].mxu0
  %v86 = vpop.f32.mrb[0].mxu0
  %v87 = vadd.f32 %v26, %v86
  %v88 = vpop.f32.mrb[0].mxu0
  %89 = vdwg.mxu0
  %90 = vst.msk [vmem:[%s3] sm:$0xff] %vm45, %v84
  %91 = vst.msk [vmem:[%s3 + $0x8] sm:$0xff] %vm45, %v87
  // Predicated region
  $region14: #{attention_layer_forward.9} parent=0 // pred_check
    _
  $region15: #{attention_layer_forward.9} parent=0 // pred_check_branch
    %93 = sbr.rel (0) target = $region17
  $region16: #{attention_layer_forward.9} parent=0 // pred_region
    _
  $region17: #{attention_layer_forward.9} parent=0 // pred_fallthru
    _
  // Predicated region
  $region18: #{attention_layer_forward.9} parent=0 // pred_check
    _
  $region19: #{attention_layer_forward.9} parent=0 // pred_check_branch
    %95 = sbr.rel (0) target = $region21
  $region20: #{attention_layer_forward.9} parent=0 // pred_region
    _
  $region21: #{attention_layer_forward.9} parent=0 // pred_fallthru
    _

// kernel: attention_layer_forward.13
$region0: #{attention_layer_forward.13}
  #allocation0 [shape = 'u32[]', space=smem, size = 0x4, offset = 0x4, fixed_abs, tag = 'smem constant byte address 0x4 - core index']
  #allocation1 [shape = 'u32[144,128]{1,0:T(1,128)}', space=vmem, size = 0x12000, scoped, tag = 'internal scratch']
  %s0 = inlined_call_operand.vmem [shape: f32[16,32], index: 0, kind: input, shape index: {}]
  %s1 = inlined_call_operand.vmem [shape: f32[16,32], index: 1, kind: input, shape index: {}]
  %s2 = inlined_call_operand.vmem [shape: f32[1,32], index: 2, kind: input, shape index: {}]
  %s3 = inlined_call_operand.vmem [shape: f32[1,32], index: 3, kind: input, shape index: {}]
  %s4 = inlined_call_operand.hbm [shape: f32[16,32], index: 4, kind: output, shape index: {}]
  %s5 = sld [smem:[#allocation0]]
  $region26: #{attention_layer_forward.13} parent=0
    _
  %s7 = ssub.s32 1, %s5
  %s8 = scalar_select 0, %s7, %s5
  $region1: #{attention_layer_forward.13} parent=0
    #allocation2 [shape = 'u8[8192]{0}', space=vmem, size = 0x2000, scoped, tag = 'output window, operand 0, single buffered']
    #allocation3 [shape = 's32[1]{0}', space=sflag, size = 0x4, scoped, tag = 'scoped memory for attention_layer_forward.13']
    %9 = vsyncpa [#allocation3], 0
    // Predicated region
    $region2: #{attention_layer_forward.13} parent=1 // pred_check
      _
    $region3: #{attention_layer_forward.13} parent=1 // pred_check_branch
      %11 = sbr.rel (0) target = $region5
    $region4: #{attention_layer_forward.13} parent=1 // pred_region
      _
    $region5: #{attention_layer_forward.13} parent=1 // pred_fallthru
      _
    // Predicated region
    $region6: #{attention_layer_forward.13} parent=1 // pred_check
      _
    $region7: #{attention_layer_forward.13} parent=1 // pred_check_branch
      %13 = sbr.rel (0) target = $region9
    $region8: #{attention_layer_forward.13} parent=1 // pred_region
      _
    $region9: #{attention_layer_forward.13} parent=1 // pred_fallthru
      _
    // Predicated region
    $region10: #{attention_layer_forward.13} parent=1 // pred_check
      _
    $region11: #{attention_layer_forward.13} parent=1 // pred_check_branch
      %15 = sbr.rel (0) target = $region13
    $region12: #{attention_layer_forward.13} parent=1 // pred_region
      _
    $region13: #{attention_layer_forward.13} parent=1 // pred_fallthru
      _
    // Predicated region
    $region14: #{attention_layer_forward.13} parent=1 // pred_check
      _
    $region15: #{attention_layer_forward.13} parent=1 // pred_check_branch
      %17 = sbr.rel (0) target = $region17
    $region16: #{attention_layer_forward.13} parent=1 // pred_region
      _
    $region17: #{attention_layer_forward.13} parent=1 // pred_fallthru
      _
    %v18 = vld [vmem:[%s0] sm:$0xff]
    %v19 = vld [vmem:[%s0 + $0x8] sm:$0xff]
    %v20 = vld [vmem:[%s1] sm:$0xff]
    %v21 = vld [vmem:[%s1 + $0x8] sm:$0xff]
    %v22 = vadd.f32 %v18, %v20
    %v23 = vadd.f32 %v19, %v21
    %vm24 = vcmask 261120
    %v25 = vsel %vm24, %v22, 0.0
    %26 = vadd.xlane.f32.xlu0 %v25
    %v27 = vpop.xlane.xlu0 %26
    %v28 = vsel %vm24, %v23, 0.0
    %29 = vadd.xlane.f32.xlu0 %v28
    %v30 = vpop.xlane.xlu0 %29
    %v31 = vrcp.pop 32.0
    %v32 = vmul.f32 %v27, %v31
    %v33 = vmul.f32 %v30, %v31
    %v34 = vsub.f32 %v22, %v32
    %v35 = vsub.f32 %v23, %v33
    %v36 = vmul.f32 %v34, %v34
    %v37 = vmul.f32 %v35, %v35
    %v38 = vsel %vm24, %v36, 0.0
    %39 = vadd.xlane.f32.xlu0 %v38
    %v40 = vpop.xlane.xlu0 %39
    %v41 = vsel %vm24, %v37, 0.0
    %42 = vadd.xlane.f32.xlu0 %v41
    %v43 = vpop.xlane.xlu0 %42
    %v44 = vmul.f32 %v40, %v31
    %v45 = vmul.f32 %v43, %v31
    %v46 = vadd.f32 %v44, 1e-05
    %v47 = vadd.f32 %v45, 1e-05
    %v48 = vrsqrt.pop %v46
    %v49 = vrsqrt.pop %v47
    %v50 = vmul.f32 %v34, %v48
    %v51 = vmul.f32 %v35, %v49
    %v52 = vld [vmem:[%s2] sm:$0x1]
    %v54 = vlaneseq
    %v55 = vshrl.u32 %v54, 7
    %v56 = vsub.s32 0, %v55
    %v57 = vrot.slane %v52, %v56
    %v59 = vmul.f32 %v50, %v57
    %v60 = vmul.f32 %v51, %v57
    %v61 = vld [vmem:[%s3] sm:$0x1]
    %v63 = vlaneseq
    %v64 = vshrl.u32 %v63, 7
    %v65 = vsub.s32 0, %v64
    %v66 = vrot.slane %v61, %v65
    %v68 = vadd.f32 %v59, %v66
    %v69 = vadd.f32 %v60, %v66
    %70 = vst.msk [vmem:[#allocation2] sm:$0xff] %vm24, %v68
    %71 = vst.msk [vmem:[#allocation2 + $0x8] sm:$0xff] %vm24, %v69
    // Predicated region
    $region18: #{attention_layer_forward.13} parent=1 // pred_check
      _
    $region19: #{attention_layer_forward.13} parent=1 // pred_check_branch
      %73 = sbr.rel (0) target = $region21
    $region20: #{attention_layer_forward.13} parent=1 // pred_region
      %s75 = ssub.s32 256, 256
      %76 = vsyncadd [#allocation3], %s75
      %s77 = sshll.u32 [#allocation2], 4
      %s78 = int_to_ptr.vmem [resolvable:$true] %s77
      %83 = dma.vmem_to_hbm [thread:$0]  %s78, 256, %s4, [#allocation3], 128, 128, 8
    $region21: #{attention_layer_forward.13} parent=1 // pred_fallthru
      _
    // Predicated region
    $region22: #{attention_layer_forward.13} parent=1 // pred_check
      _
    $region23: #{attention_layer_forward.13} parent=1 // pred_check_branch
      %85 = sbr.rel (0) target = $region25
    $region24: #{attention_layer_forward.13} parent=1 // pred_region
      %86 = dma.done [#allocation3], 256
    $region25: #{attention_layer_forward.13} parent=1 // pred_fallthru
      _
    %87 = vsyncpa [#allocation3], 1

// kernel: attention_layer_forward.12
$region0: #{attention_layer_forward.12}
  #allocation0 [shape = 'u32[]', space=smem, size = 0x4, offset = 0x4, fixed_abs, tag = 'smem constant byte address 0x4 - core index']
  #allocation1 [shape = 'u32[144,128]{1,0:T(1,128)}', space=vmem, size = 0x12000, scoped, tag = 'internal scratch']
  %s0 = inlined_call_operand.vmem [shape: bf16[16,64], index: 0, kind: input, shape index: {}]
  %s1 = inlined_call_operand.vmem [shape: bf16[64,32], index: 1, kind: input, shape index: {}]
  %s2 = inlined_call_operand.vmem [shape: f32[1,32], index: 2, kind: input, shape index: {}]
  %s3 = inlined_call_operand.vmem [shape: f32[16,32], index: 3, kind: output, shape index: {}]
  %s4 = sld [smem:[#allocation0]]
  $region22: #{attention_layer_forward.12} parent=0
    _
  %s6 = ssub.s32 1, %s4
  %s7 = scalar_select 0, %s6, %s4
  // Predicated region
  $region2: #{attention_layer_forward.12} parent=0 // pred_check
    _
  $region3: #{attention_layer_forward.12} parent=0 // pred_check_branch
    %9 = sbr.rel (0) target = $region5
  $region4: #{attention_layer_forward.12} parent=0 // pred_region
    _
  $region5: #{attention_layer_forward.12} parent=0 // pred_fallthru
    _
  // Predicated region
  $region6: #{attention_layer_forward.12} parent=0 // pred_check
    _
  $region7: #{attention_layer_forward.12} parent=0 // pred_check_branch
    %11 = sbr.rel (0) target = $region9
  $region8: #{attention_layer_forward.12} parent=0 // pred_region
    _
  $region9: #{attention_layer_forward.12} parent=0 // pred_fallthru
    _
  // Predicated region
  $region10: #{attention_layer_forward.12} parent=0 // pred_check
    _
  $region11: #{attention_layer_forward.12} parent=0 // pred_check_branch
    %13 = sbr.rel (0) target = $region13
  $region12: #{attention_layer_forward.12} parent=0 // pred_region
    _
  $region13: #{attention_layer_forward.12} parent=0 // pred_fallthru
    _
  %v15 = vld [vmem:[%s0] sm:$0xf]
  %v16 = vld [vmem:[%s0 + $0x4] sm:$0xf]
  %v17 = vld [vmem:[%s1] sm:$0xf]
  %v18 = vld [vmem:[%s1 + $0x4] sm:$0xf]
  %v19 = vld [vmem:[%s1 + $0x8] sm:$0xf]
  %v20 = vld [vmem:[%s1 + $0xc] sm:$0xf]
  %v21 = vld [vmem:[%s1 + $0x10] sm:$0xf]
  %v22 = vld [vmem:[%s1 + $0x14] sm:$0xf]
  %v23 = vld [vmem:[%s1 + $0x18] sm:$0xf]
  %v24 = vld [vmem:[%s1 + $0x1c] sm:$0xf]
  %v25 = vld [vmem:[%s2] sm:$0x1]
  %v27 = vlaneseq
  %v28 = vshrl.u32 %v27, 7
  %v29 = vsub.s32 0, %v28
  %v30 = vrot.slane %v25, %v29
  %v34 = vunpack.c.l.b16 %v15
  %v35 = vunpack.c.l.b16 %v16
  %v36 = vpack.c.b16 %v35, %v34
  %v45 = vunpack.c.l.b16 %v17
  %v46 = vunpack.c.l.b16 %v18
  %v47 = vunpack.c.l.b16 %v19
  %v48 = vunpack.c.l.b16 %v20
  %v49 = vunpack.c.l.b16 %v21
  %v50 = vunpack.c.l.b16 %v22
  %v51 = vunpack.c.l.b16 %v23
  %v52 = vunpack.c.l.b16 %v24
  %v53 = vpack.c.b16 %v46, %v45
  %v54 = vpack.c.b16 %v48, %v47
  %v55 = vpack.c.b16 %v50, %v49
  %v56 = vpack.c.b16 %v52, %v51
  %vm61 = vcmask 523264
  %v63 = vsel %vm61, %v36, 0
  %65 = vmatprep.subr.bf16.mxu0 0
  %66 = vmatpush1.bf16.msra.mxu0 %v53
  %67 = vmatprep.subr.bf16.mxu0 0
  %68 = vmatpush1.bf16.msra.mxu0 %v54
  %69 = vmatprep.subr.bf16.mxu0 0
  %70 = vmatpush1.bf16.msra.mxu0 %v55
  %71 = vmatprep.subr.bf16.mxu0 0
  %72 = vmatpush1.bf16.msra.mxu0 %v56
  %73 = vmatprep.subr.bf16.mxu0 0
  %74 = vmatpush1.bf16.msra.mxu0 0
  %75 = vmatprep.subr.bf16.mxu0 0
  %76 = vmatpush1.bf16.msra.mxu0 0
  %77 = vmatprep.subr.bf16.mxu0 0
  %78 = vmatpush1.bf16.msra.mxu0 0
  %79 = vmatprep.subr.bf16.mxu0 0
  %80 = vmatpush1.bf16.msra.mxu0 0
  %81 = vmatprep.subr.bf16.mxu0 0
  %82 = vmatpush1.bf16.msra.mxu0 0
  %83 = vmatprep.subr.bf16.mxu0 0
  %84 = vmatpush1.bf16.msra.mxu0 0
  %85 = vmatprep.subr.bf16.mxu0 0
  %86 = vmatpush1.bf16.msra.mxu0 0
  %87 = vmatprep.subr.bf16.mxu0 0
  %88 = vmatpush1.bf16.msra.mxu0 0
  %89 = vmatprep.subr.bf16.mxu0 0
  %90 = vmatpush1.bf16.msra.mxu0 0
  %91 = vmatprep.subr.bf16.mxu0 0
  %92 = vmatpush1.bf16.msra.mxu0 0
  %93 = vmatprep.subr.bf16.mxu0 0
  %94 = vmatpush1.bf16.msra.mxu0 0
  %95 = vmatprep.subr.bf16.mxu0 0
  %96 = vmatpush1.bf16.msra.mxu0 0
  %97 = vmatprep.mubr.bf16.mxu0 0
  %98 = vmatmul.mubr.bf16.gmra.mrb[0].mxu0 %v63
  %v99 = vpop.f32.mrb[0].mxu0
  %v100 = vadd.f32 %v30, %v99
  %v101 = vpop.f32.mrb[0].mxu0
  %v102 = vpop.f32.mrb[0].mxu0
  %v103 = vadd.f32 %v30, %v102
  %v104 = vpop.f32.mrb[0].mxu0
  %105 = vdwg.mxu0
  %vm106 = vcmask 261120
  %107 = vst.msk [vmem:[%s3] sm:$0xff] %vm106, %v100
  %108 = vst.msk [vmem:[%s3 + $0x8] sm:$0xff] %vm106, %v103
  // Predicated region
  $region14: #{attention_layer_forward.12} parent=0 // pred_check
    _
  $region15: #{attention_layer_forward.12} parent=0 // pred_check_branch
    %110 = sbr.rel (0) target = $region17
  $region16: #{attention_layer_forward.12} parent=0 // pred_region
    _
  $region17: #{attention_layer_forward.12} parent=0 // pred_fallthru
    _
  // Predicated region
  $region18: #{attention_layer_forward.12} parent=0 // pred_check
    _
  $region19: #{attention_layer_forward.12} parent=0 // pred_check_branch
    %112 = sbr.rel (0) target = $region21
  $region20: #{attention_layer_forward.12} parent=0 // pred_region
    _
  $region21: #{attention_layer_forward.12} parent=0 // pred_fallthru
    _

// kernel: attention_layer_forward.11
$region0: #{attention_layer_forward.11}
  #allocation0 [shape = 'u32[]', space=smem, size = 0x4, offset = 0x4, fixed_abs, tag = 'smem constant byte address 0x4 - core index']
  #allocation1 [shape = 'u32[144,128]{1,0:T(1,128)}', space=vmem, size = 0x12000, scoped, tag = 'internal scratch']
  %s0 = inlined_call_operand.vmem [shape: bf16[16,32], index: 0, kind: input, shape index: {}]
  %s1 = inlined_call_operand.vmem [shape: bf16[32,64], index: 1, kind: input, shape index: {}]
  %s2 = inlined_call_operand.vmem [shape: f32[1,64], index: 2, kind: input, shape index: {}]
  %s3 = inlined_call_operand.vmem [shape: bf16[16,64], index: 3, kind: output, shape index: {}]
  %s4 = sld [smem:[#allocation0]]
  $region22: #{attention_layer_forward.11} parent=0
    _
  %s6 = ssub.s32 1, %s4
  %s7 = scalar_select 0, %s6, %s4
  // Predicated region
  $region2: #{attention_layer_forward.11} parent=0 // pred_check
    _
  $region3: #{attention_layer_forward.11} parent=0 // pred_check_branch
    %9 = sbr.rel (0) target = $region5
  $region4: #{attention_layer_forward.11} parent=0 // pred_region
    _
  $region5: #{attention_layer_forward.11} parent=0 // pred_fallthru
    _
  // Predicated region
  $region6: #{attention_layer_forward.11} parent=0 // pred_check
    _
  $region7: #{attention_layer_forward.11} parent=0 // pred_check_branch
    %11 = sbr.rel (0) target = $region9
  $region8: #{attention_layer_forward.11} parent=0 // pred_region
    _
  $region9: #{attention_layer_forward.11} parent=0 // pred_fallthru
    _
  // Predicated region
  $region10: #{attention_layer_forward.11} parent=0 // pred_check
    _
  $region11: #{attention_layer_forward.11} parent=0 // pred_check_branch
    %13 = sbr.rel (0) target = $region13
  $region12: #{attention_layer_forward.11} parent=0 // pred_region
    _
  $region13: #{attention_layer_forward.11} parent=0 // pred_fallthru
    _
  %v15 = vld [vmem:[%s0] sm:$0xf]
  %v16 = vld [vmem:[%s0 + $0x4] sm:$0xf]
  %v17 = vld [vmem:[%s1] sm:$0xf]
  %v18 = vld [vmem:[%s1 + $0x4] sm:$0xf]
  %v19 = vld [vmem:[%s1 + $0x8] sm:$0xf]
  %v20 = vld [vmem:[%s1 + $0xc] sm:$0xf]
  %v21 = vld [vmem:[%s2] sm:$0x1]
  %v23 = vlaneseq
  %v24 = vshrl.u32 %v23, 7
  %v25 = vsub.s32 0, %v24
  %v26 = vrot.slane %v21, %v25
  %v30 = vunpack.c.l.b16 %v15
  %v31 = vunpack.c.l.b16 %v16
  %v32 = vpack.c.b16 %v31, %v30
  %v37 = vunpack.c.l.b16 %v17
  %v38 = vunpack.c.l.b16 %v18
  %v39 = vunpack.c.l.b16 %v19
  %v40 = vunpack.c.l.b16 %v20
  %v41 = vpack.c.b16 %v38, %v37
  %v42 = vpack.c.b16 %v40, %v39
  %vm45 = vcmask 261120
  %v47 = vsel %vm45, %v32, 0
  %49 = vmatprep.subr.bf16.mxu0 0
  %50 = vmatpush1.bf16.msra.mxu0 %v41
  %51 = vmatprep.subr.bf16.mxu0 0
  %52 = vmatpush1.bf16.msra.mxu0 %v42
  %53 = vmatprep.subr.bf16.mxu0 0
  %54 = vmatpush1.bf16.msra.mxu0 0
  %55 = vmatprep.subr.bf16.mxu0 0
  %56 = vmatpush1.bf16.msra.mxu0 0
  %57 = vmatprep.subr.bf16.mxu0 0
  %58 = vmatpush1.bf16.msra.mxu0 0
  %59 = vmatprep.subr.bf16.mxu0 0
  %60 = vmatpush1.bf16.msra.mxu0 0
  %61 = vmatprep.subr.bf16.mxu0 0
  %62 = vmatpush1.bf16.msra.mxu0 0
  %63 = vmatprep.subr.bf16.mxu0 0
  %64 = vmatpush1.bf16.msra.mxu0 0
  %65 = vmatprep.subr.bf16.mxu0 0
  %66 = vmatpush1.bf16.msra.mxu0 0
  %67 = vmatprep.subr.bf16.mxu0 0
  %68 = vmatpush1.bf16.msra.mxu0 0
  %69 = vmatprep.subr.bf16.mxu0 0
  %70 = vmatpush1.bf16.msra.mxu0 0
  %71 = vmatprep.subr.bf16.mxu0 0
  %72 = vmatpush1.bf16.msra.mxu0 0
  %73 = vmatprep.subr.bf16.mxu0 0
  %74 = vmatpush1.bf16.msra.mxu0 0
  %75 = vmatprep.subr.bf16.mxu0 0
  %76 = vmatpush1.bf16.msra.mxu0 0
  %77 = vmatprep.subr.bf16.mxu0 0
  %78 = vmatpush1.bf16.msra.mxu0 0
  %79 = vmatprep.subr.bf16.mxu0 0
  %80 = vmatpush1.bf16.msra.mxu0 0
  %81 = vmatprep.mubr.bf16.mxu0 0
  %82 = vmatmul.mubr.bf16.gmra.mrb[0].mxu0 %v47
  %v83 = vpop.f32.mrb[0].mxu0
  %v84 = vadd.f32 %v26, %v83
  %v85 = vpop.f32.mrb[0].mxu0
  %v86 = vpop.f32.mrb[0].mxu0
  %v87 = vadd.f32 %v26, %v86
  %v88 = vpop.f32.mrb[0].mxu0
  %89 = vdwg.mxu0
  %v90 = vmul.f32 %v84, 0.5
  %v91 = vmul.f32 %v87, 0.5
  %v92 = vmul.f32 %v84, %v84
  %v93 = vmul.f32 %v87, %v87
  %v94 = vmul.f32 %v92, %v84
  %v95 = vmul.f32 %v93, %v87
  %v96 = vmul.f32 %v94, 0.044715
  %v97 = vmul.f32 %v95, 0.044715
  %v98 = vadd.f32 %v84, %v96
  %v99 = vadd.f32 %v87, %v97
  %v100 = vmul.f32 %v98, 0.7978846
  %v101 = vmul.f32 %v99, 0.7978846
  %v102 = vtanh.pop %v100
  %v103 = vtanh.pop %v101
  %v104 = vadd.f32 %v102, 1.0
  %v105 = vadd.f32 %v103, 1.0
  %v106 = vmul.f32 %v90, %v104
  %v107 = vmul.f32 %v91, %v105
  %v108 = vpack.c.bf16 %v107, %v106
  %v110 = vunpack.c.l.b16 %v108
  %v111 = vunpack.c.h.b16 %v108
  %v112 = vpack.c.b16 %v110, %v110
  %v113 = vpack.c.b16 %v111, %v111
  %vm116 = vcmask 519168
  %117 = vst.msk [vmem:[%s3] sm:$0xf] %vm116, %v112
  %118 = vst.msk [vmem:[%s3 + $0x4] sm:$0xf] %vm116, %v113
  // Predicated region
  $region14: #{attention_layer_forward.11} parent=0 // pred_check
    _
  $region15: #{attention_layer_forward.11} parent=0 // pred_check_branch
    %120 = sbr.rel (0) target = $region17
  $region16: #{attention_layer_forward.11} parent=0 // pred_region
    _
  $region17: #{attention_layer_forward.11} parent=0 // pred_fallthru
    _
  // Predicated region
  $region18: #{attention_layer_forward.11} parent=0 // pred_check
    _
  $region19: #{attention_layer_forward.11} parent=0 // pred_check_branch
    %122 = sbr.rel (0) target = $region21
  $region20: #{attention_layer_forward.11} parent=0 // pred_region
    _
  $region21: #{attention_layer_forward.11} parent=0 // pred_fallthru
    _

</llo_original>
